<compile_context>
chip_gen: v5e
topology: v5e:2x2
jax: 0.10.0
libtpu: 0.0.40
codegen_flags: <defaults>
</compile_context>

<pallas_src>
import functools
import math

import jax
import jax.numpy as jnp
from jax.experimental import pallas as pl
from jax.experimental.pallas import tpu as pltpu

MIN_NORM = 1e-15
BALL_EPS = 4e-3                                             # f32 Poincare-ball boundary eps
_ATANH_MAX = 0.5 * math.log((2.0 - BALL_EPS) / BALL_EPS)    # artanh(1 - BALL_EPS)
DPAD = 128                                                  # lane-dense feature padding
FUSED_MAX_NPAD = 1024                                       # adj (bf16) <= 2 MiB -> fuse
_VMEM_LIMIT_BYTES = 48 * 1024 * 1024                        # raise scoped-VMEM default
                                                            # (16/32 MiB), safe on v5e/v6e/v7x

SMEM_SPEC = pl.BlockSpec(memory_space=pltpu.MemorySpace.SMEM)


def _round_up(v, m):
    return (v + m - 1) // m * m


# --------------------- in-kernel Poincare-ball math (jnp values) ---------------------


def _sq_norm(x):
    return jnp.sum(x * x, axis=-1, keepdims=True)


def _norm(x):
    return jnp.maximum(jnp.sqrt(jnp.maximum(_sq_norm(x), 0.0)), MIN_NORM)


def _artanh(x):
    x = jnp.clip(x, -1.0 + 1e-7, 1.0 - 1e-7)
    return 0.5 * jnp.log((1.0 + x) / (1.0 - x))


def _proj(x, sqrt_c):
    # clamp onto the ball; only perturbs rows that actually need clipping.
    xn = _norm(x)
    maxnorm = (1.0 - BALL_EPS) / sqrt_c
    return jnp.where(xn > maxnorm, x * (maxnorm / xn), x)


def _expmap0_proj(u, sqrt_c):
    # proj(expmap0(u, c), c): ||expmap0(u)|| = tanh(sqrt_c||u||)/sqrt_c, so the proj
    # is just a clamp of the tanh at (1-eps) -- the second norm/where is redundant.
    un = _norm(u)
    scale = jnp.minimum(jnp.tanh(sqrt_c * un), 1.0 - BALL_EPS)
    return u * (scale / (sqrt_c * un))


def _proj_logmap0(p, sqrt_c):
    # logmap0(proj(p, c), c) with a single norm / artanh.
    pn = _norm(p)
    clipped = jnp.minimum(pn, (1.0 - BALL_EPS) / sqrt_c)
    return p * (_artanh(sqrt_c * clipped) / (sqrt_c * pn))


def _mobius_add(x, y, c, y2=None):
    x2 = _sq_norm(x)
    if y2 is None:
        y2 = _sq_norm(y)
    xy = jnp.sum(x * y, axis=-1, keepdims=True)
    num = (1.0 + 2.0 * c * xy + c * y2) * x + (1.0 - c * x2) * y
    den = jnp.maximum(1.0 + 2.0 * c * xy + c * c * x2 * y2, MIN_NORM)
    return num / den


def _mobius_scalar_mul(r, x, sqrt_c):
    xn = _norm(x)
    return x * (jnp.tanh(r * _artanh(sqrt_c * xn)) / (sqrt_c * xn))


def _curv_transfer(p, sqrt_ci, sqrt_co):
    # proj(expmap0(logmap0(p, c_i), c_o), c_o) fused: one norm / artanh / tanh.
    pn = _norm(p)
    t = jnp.tanh((sqrt_co / sqrt_ci) * _artanh(sqrt_ci * pn))
    return p * (jnp.minimum(t, 1.0 - BALL_EPS) / (sqrt_co * pn))


def _hyp_linear_tangent_math(x, w, hb, hb_sq, c_in, sqrt_c, *, lift_input):
    """[optional expmap0 lift] -> HypLinear -> fused proj+logmap0 tangent features."""
    if lift_input:
        # initial embedding: proj(expmap0(proj_tan0(x, c0), c0), c0); proj_tan0 = id.
        x = _expmap0_proj(x, sqrt_c)
    # TODO(synk): HypLinear weight dropout (p=0.05) skipped -- inference semantics.
    x_sq = _sq_norm(x)
    x_norm = jnp.maximum(jnp.sqrt(x_sq), MIN_NORM)
    mx = jnp.dot(x, w, preferred_element_type=jnp.float32)
    mx_sq = _sq_norm(mx)
    mx_norm = jnp.maximum(jnp.sqrt(mx_sq), MIN_NORM)
    t = jnp.tanh((mx_norm / x_norm) * _artanh(sqrt_c * x_norm))
    res = mx * (jnp.minimum(t, 1.0 - BALL_EPS)          # proj fused into the tanh clamp
                / (mx_norm * sqrt_c))
    res = jnp.where(mx_sq == 0.0, 0.0, res)             # zero-row guard on existing sq-norm
    h = _mobius_add(res, hb, c_in, y2=hb_sq)            # hyp bias + its sq-norm hoisted
    return _proj_logmap0(h, sqrt_c)


def _agg_act_epilogue(support, c_in, c_out):
    sqrt_ci = jnp.sqrt(c_in)
    sqrt_co = jnp.sqrt(c_out)
    # HypAgg: h = proj(expmap0(support, c_in)); HypAct then takes logmap0(h, c_in).
    # Analytically logmap0(proj(expmap0(u, c), c), c) == u with ||u|| clipped at
    # artanh(1-eps)/sqrt(c), so the round trip collapses to one norm clamp.
    un = _norm(support)
    max_t = _ATANH_MAX / sqrt_ci
    u = jnp.where(un > max_t, support * (max_t / un), support)
    xt = jnp.tanh(u)                        # tanh activation in the tangent space
    return _expmap0_proj(xt, sqrt_co)       # proj(expmap0(xt, c_out), c_out)


def _residual_midpoint(x_old, x_new, sqrt_ci, sqrt_co, c_out):
    # residual: curvature transfer of previous embedding + Poincare midpoint.
    # TODO(synk): exact mid_point_poincare impl unavailable; Mobius geodesic midpoint
    # m = x (+)_c (0.5 (x)_c ((-x) (+)_c y)) is used instead.
    x_tc = _curv_transfer(x_old, sqrt_ci, sqrt_co)
    d = _mobius_add(-x_tc, x_new, c_out)
    mid = _mobius_add(x_tc, _mobius_scalar_mul(0.5, d, sqrt_co), c_out)
    return _proj(mid, sqrt_co)


# -------------------------------- Pallas kernels -----------------------------------


def _fused_layer_kernel(c_ref, x_ref, w_ref, hb_ref, adj_ref, o_ref, *, lift_input, residual):
    """Whole layer in VMEM (small graphs): HypLinear + aggregation + epilogue (+ residual)."""
    c_in, c_out, hb_sq = c_ref[0], c_ref[1], c_ref[2]
    sqrt_ci = jnp.sqrt(c_in)
    sqrt_co = jnp.sqrt(c_out)
    x_in = x_ref[...]
    ht = _hyp_linear_tangent_math(x_in, w_ref[...], hb_ref[...], hb_sq, c_in, sqrt_ci,
                                  lift_input=lift_input)
    support = jnp.dot(adj_ref[...], ht.astype(jnp.bfloat16),
                      preferred_element_type=jnp.float32)
    x_new = _agg_act_epilogue(support, c_in, c_out)
    if residual:
        o_ref[...] = _residual_midpoint(x_in, x_new, sqrt_ci, sqrt_co, c_out)
    else:
        o_ref[...] = x_new


def _hyp_linear_kernel(c_ref, x_ref, w_ref, hb_ref, ht_ref, *, lift_input):
    """Kernel A: HypLinear -> tangent features (bf16) for the tiled path."""
    c_in, hb_sq = c_ref[0], c_ref[1]
    sqrt_c = jnp.sqrt(c_in)
    ht = _hyp_linear_tangent_math(x_ref[...], w_ref[...], hb_ref[...], hb_sq, c_in,
                                  sqrt_c, lift_input=lift_input)
    ht_ref[...] = ht.astype(ht_ref.dtype)


def _agg_act_kernel(c_ref, adj_ref, scale_ref, ht_ref, *rest, ht_resident, residual):
    """Kernel B: (int8 adj * row_scale) @ tangent features, K-tiled with an f32 VMEM
    accumulator; fused HypAgg/HypAct epilogue (+ residual) at the last K step."""
    if residual:
        xold_ref, o_ref, acc_ref = rest
    else:
        o_ref, acc_ref = rest
    k = pl.program_id(1)

    @pl.when(k == 0)
    def _init():
        acc_ref[...] = jnp.zeros_like(acc_ref)

    if ht_resident:
        # tangent features are fully VMEM-resident; slice this K block in place.
        tk = adj_ref.shape[1]
        off = pl.multiple_of(k * tk, tk)
        ht_blk = ht_ref[pl.ds(off, tk), :]
    else:
        ht_blk = ht_ref[...]
    acc_ref[...] += jnp.dot(adj_ref[...].astype(jnp.bfloat16), ht_blk,
                            preferred_element_type=jnp.float32)

    @pl.when(k == pl.num_programs(1) - 1)
    def _finalize():
        c_in, c_out = c_ref[0], c_ref[1]
        support = acc_ref[...] * scale_ref[...]       # undo per-row int8 scaling
        x_new = _agg_act_epilogue(support, c_in, c_out)
        if residual:
            sqrt_ci = jnp.sqrt(c_in)
            sqrt_co = jnp.sqrt(c_out)
            o_ref[...] = _residual_midpoint(xold_ref[...], x_new, sqrt_ci, sqrt_co, c_out)
        else:
            o_ref[...] = x_new


# -------------------------------- wrappers ------------------------------------------


def _plan_tiles(n):
    """(n_pad, row_tile, k_tile) for the tiled (large-N) path. Big tiles: the
    aggregation kernel is HBM-bound, and ~512+-wide blocks reach ~85% of HBM roofline
    vs ~30-60% for 128-256; the live working set (<= a few MiB) is far below any
    generation's VMEM once vmem_limit_bytes is raised."""
    if n <= 128:
        n_pad = _round_up(n, 8)
        return n_pad, n_pad, n_pad
    if n <= 1024:
        n_pad = _round_up(n, 128)
        return n_pad, 128, n_pad
    n_pad = _round_up(n, 512)
    tk = 2048 if n_pad % 2048 == 0 else (1024 if n_pad % 1024 == 0 else 512)
    return n_pad, 512, tk


def _lift_bias(b_pad, c_in):
    # proj(expmap0(bias, c_in), c_in) and its squared norm -- hoisted out of the tiled
    # kernels: a single (1, D) transcendental chain computed once per layer.
    sqrt_c = jnp.sqrt(jnp.float32(c_in))
    bn = jnp.maximum(jnp.sqrt(jnp.sum(b_pad * b_pad, axis=-1, keepdims=True)), MIN_NORM)
    scale = jnp.minimum(jnp.tanh(sqrt_c * bn), 1.0 - BALL_EPS) / (sqrt_c * bn)
    hb = b_pad * scale
    hb_sq = jnp.sum(hb * hb)
    return hb, hb_sq


def _quantize_adj(adj, n, n_pad):
    """Per-row symmetric int8 adjacency. Row-normalized adjacency has row-max = 1/deg,
    so scaled nonzeros land exactly on 127 for unweighted graphs (lossless) while
    halving the dominant HBM stream of the aggregation kernel. The i8->bf16 cast
    happens in VMEM, so this needs no integer MXU path (works on v5e/v6e/v7x alike).
    Quantize at (N, N) and pad in int8: no f32 n_pad^2 intermediate."""
    row_max = jnp.max(jnp.abs(adj), axis=1, keepdims=True)
    scale = jnp.where(row_max > 0.0, row_max / 127.0, 1.0).astype(jnp.float32)
    q = jnp.clip(jnp.round(adj / scale), -127.0, 127.0).astype(jnp.int8)
    q_pad = jnp.zeros((n_pad, n_pad), jnp.int8).at[:n, :n].set(q)
    s_pad = jnp.zeros((n_pad, 1), jnp.float32).at[:n, :].set(scale)
    return q_pad, s_pad


def _fused_layer(x_pad, w_pad, hb, hb_sq, adj_bf16, c_in, c_out, *,
                 lift_input, residual, n_pad):
    kernel = functools.partial(_fused_layer_kernel, lift_input=lift_input,
                               residual=residual)
    c_arr = jnp.concatenate([jnp.asarray([c_in, c_out], jnp.float32),
                             jnp.reshape(hb_sq, (1,)).astype(jnp.float32)])
    full = lambda i: (0, 0)
    return pl.pallas_call(
        kernel,
        out_shape=jax.ShapeDtypeStruct((n_pad, DPAD), jnp.float32),
        grid=(1,),
        in_specs=[
            SMEM_SPEC,                                        # [c_in, c_out, ||hb||^2]
            pl.BlockSpec((n_pad, DPAD), full),                # x (prev embedding / feats)
            pl.BlockSpec((DPAD, DPAD), full),                 # W
            pl.BlockSpec((1, DPAD), full),                    # hyperbolic bias
            pl.BlockSpec((n_pad, n_pad), full),               # adj (bf16, resident)
        ],
        out_specs=pl.BlockSpec((n_pad, DPAD), full),
        compiler_params=pltpu.CompilerParams(dimension_semantics=("arbitrary",)),
    )(c_arr, x_pad, w_pad, hb, adj_bf16)


def _hyp_linear_call(x_pad, w_pad, hb, hb_sq, c_in, *, lift_input, n_pad, tm):
    kernel = functools.partial(_hyp_linear_kernel, lift_input=lift_input)
    c_arr = jnp.concatenate([jnp.asarray([c_in], jnp.float32),
                             jnp.reshape(hb_sq, (1,)).astype(jnp.float32)])
    return pl.pallas_call(
        kernel,
        out_shape=jax.ShapeDtypeStruct((n_pad, DPAD), jnp.bfloat16),
        grid=(n_pad // tm,),
        in_specs=[
            SMEM_SPEC,                                        # [c_in, ||hb||^2]
            pl.BlockSpec((tm, DPAD), lambda i: (i, 0)),       # x rows
            pl.BlockSpec((DPAD, DPAD), lambda i: (0, 0)),     # W (resident)
            pl.BlockSpec((1, DPAD), lambda i: (0, 0)),        # hyperbolic bias
        ],
        out_specs=pl.BlockSpec((tm, DPAD), lambda i: (i, 0)),
        compiler_params=pltpu.CompilerParams(
            dimension_semantics=("parallel",),
            vmem_limit_bytes=_VMEM_LIMIT_BYTES),
    )(c_arr, x_pad, w_pad, hb)


def _aggregate_activate(adj_q, adj_scale, ht, c_in, c_out, *, n_pad, tm, tk, x_old=None):
    # keep the tangent features fully VMEM-resident (no per-row-tile re-streaming)
    # unless the graph is so large that residency itself threatens VMEM.
    ht_resident = (n_pad * DPAD * 2) <= (8 * 1024 * 1024)
    residual = x_old is not None
    c_arr = jnp.asarray([c_in, c_out], jnp.float32)
    adj_spec = pl.BlockSpec((tm, tk), lambda i, k: (i, k))
    scale_spec = pl.BlockSpec((tm, 1), lambda i, k: (i, 0))
    if ht_resident:
        ht_spec = pl.BlockSpec((n_pad, DPAD), lambda i, k: (0, 0))
    else:
        ht_spec = pl.BlockSpec((tk, DPAD), lambda i, k: (k, 0))
    row_spec = pl.BlockSpec((tm, DPAD), lambda i, k: (i, 0))

    kernel = functools.partial(_agg_act_kernel, ht_resident=ht_resident,
                               residual=residual)
    in_specs = [SMEM_SPEC, adj_spec, scale_spec, ht_spec]
    args = [c_arr, adj_q, adj_scale, ht]
    if residual:
        in_specs.append(row_spec)
        args.append(x_old)
    return pl.pallas_call(
        kernel,
        out_shape=jax.ShapeDtypeStruct((n_pad, DPAD), jnp.float32),
        grid=(n_pad // tm, n_pad // tk),               # rows parallel, K reduction last
        in_specs=in_specs,
        out_specs=row_spec,
        scratch_shapes=[pltpu.VMEM((tm, DPAD), jnp.float32)],
        compiler_params=pltpu.CompilerParams(
            dimension_semantics=("parallel", "arbitrary"),
            vmem_limit_bytes=_VMEM_LIMIT_BYTES),
    )(*args)


def hgcn_residual_forward(x, adj, params, curvatures, *, force_tiled=False):
    """Forward pass of HGCNResidual (inference).

    x: (N, input_dim) f32 node features.
    adj: (N, N) f32 dense row-normalized adjacency (edge_index densified).
    params: list of (W, b) per HGC layer, W: (d_in, d_out) (transposed vs torch),
            b: (1, d_out).
    curvatures: list of floats, length num_layers + 1.
    force_tiled: skip the fused small-graph path (used to exercise the tiled kernels).
    """
    # TODO(synk): edge_attr branch skipped (edge_dim=0 default, graph has no edge_attr).
    # TODO(synk): use_att=True DenseAtt attention not reproducible (hyp_layers source
    # unavailable); plain normalized-adjacency aggregation is used.
    n, d_in = x.shape
    d_out = params[-1][0].shape[1]

    n_pad_small = _round_up(n, 8)
    fused = (not force_tiled) and (n_pad_small <= FUSED_MAX_NPAD)

    if fused:
        n_pad = n_pad_small
        # cast-then-pad: no f32 n_pad^2 intermediate.
        adj_bf16 = jnp.zeros((n_pad, n_pad), jnp.bfloat16).at[:n, :n].set(
            adj.astype(jnp.bfloat16))
    else:
        n_pad, tm, tk = _plan_tiles(n)
        adj_q, adj_scale = _quantize_adj(adj, n, n_pad)
        # kernel A's row tile is decoupled from kernel B's (its VMEM footprint is tiny).
        tm_a = n_pad if n_pad <= 1024 else 512

    # Pad once: features to 128 lanes (lane-dense stores / MXU columns), nodes to the
    # row tile; zero padding is exact for all the norm / dot reductions used.
    x_pad = jnp.zeros((n_pad, DPAD), jnp.float32).at[:n, :d_in].set(x)

    x_hyp = x_pad                            # layer 0 performs the expmap0 lift in-kernel
    for i, (w, b) in enumerate(params):
        c_in, c_out = curvatures[i], curvatures[i + 1]
        di, do = w.shape
        w_pad = jnp.zeros((DPAD, DPAD), jnp.float32).at[:di, :do].set(w)
        b_pad = jnp.zeros((1, DPAD), jnp.float32).at[:, :do].set(b)
        hb, hb_sq = _lift_bias(b_pad, c_in)

        # torch.utils.checkpoint is a training-memory optimization -> no-op for inference.
        if fused:
            x_hyp = _fused_layer(x_hyp, w_pad, hb, hb_sq, adj_bf16, c_in, c_out,
                                 lift_input=(i == 0), residual=(i >= 1), n_pad=n_pad)
        else:
            ht = _hyp_linear_call(x_hyp, w_pad, hb, hb_sq, c_in,
                                  lift_input=(i == 0), n_pad=n_pad, tm=tm_a)
            x_hyp = _aggregate_activate(adj_q, adj_scale, ht, c_in, c_out,
                                        n_pad=n_pad, tm=tm, tk=tk,
                                        x_old=None if i == 0 else x_hyp)
    return x_hyp[:n, :d_out]


# ----------------------------------- driver -----------------------------------------

if __name__ == "__main__":
    input_dim, hidden_dim, num_layers = 10, 16, 2
    curvatures = [1.0] * (num_layers + 1)

    def make_inputs(key, n):
        k_x, k_adj, k_w, k_b = jax.random.split(key, 4)
        x = 0.5 * jax.random.normal(k_x, (n, input_dim), dtype=jnp.float32)
        # dense graph: random symmetric adjacency with self-loops, row-normalized
        a = (jax.random.uniform(k_adj, (n, n)) < 0.25).astype(jnp.float32)
        a = jnp.maximum(a, a.T) + jnp.eye(n, dtype=jnp.float32)
        adj = a / jnp.sum(a, axis=1, keepdims=True)
        dims = [input_dim] + [hidden_dim] * (num_layers - 1) + [hidden_dim]
        params = []
        w_keys = jax.random.split(k_w, len(dims) - 1)
        b_keys = jax.random.split(k_b, len(dims) - 1)
        for i in range(len(dims) - 1):
            w = jax.random.normal(w_keys[i], (dims[i], dims[i + 1]), dtype=jnp.float32)
            w = w * (1.0 / jnp.sqrt(jnp.float32(dims[i])))
            b = 0.01 * jax.random.normal(b_keys[i], (1, dims[i + 1]), dtype=jnp.float32)
            params.append((w, b))
        return x, adj, params

    # 1) small graph -> fused single-kernel-per-layer path
    x, adj, params = make_inputs(jax.random.PRNGKey(0), 16)
    fwd = jax.jit(functools.partial(hgcn_residual_forward,
                                    params=params, curvatures=curvatures))
    out = jax.block_until_ready(fwd(x, adj))
    assert out.shape == (16, hidden_dim)
    assert bool(jnp.all(jnp.isfinite(out)))

    # 2) medium graph, force the tiled two-kernel path (int8 adjacency + resident
    #    tangent features + K-tiled accumulator) so that code path is exercised too.
    x2, adj2, params2 = make_inputs(jax.random.PRNGKey(1), 256)
    fwd2 = jax.jit(functools.partial(hgcn_residual_forward, params=params2,
                                     curvatures=curvatures, force_tiled=True))
    out2 = jax.block_until_ready(fwd2(x2, adj2))
    assert out2.shape == (256, hidden_dim)
    assert bool(jnp.all(jnp.isfinite(out2)))

    print("KERNEL_OK")
</pallas_src>

<mosaic_0001>
module attributes {stable_mosaic.version = 11 : i64} {
  func.func @_fused_layer_kernel(%arg0: i32, %arg1: memref<3xf32, #tpu.memory_space<smem>>, %arg2: memref<16x128xf32, #tpu.memory_space<vmem>>, %arg3: memref<128x128xf32, #tpu.memory_space<vmem>>, %arg4: memref<1x128xf32, #tpu.memory_space<vmem>>, %arg5: memref<16x16xbf16, #tpu.memory_space<vmem>>, %arg6: memref<16x128xf32, #tpu.memory_space<vmem>>) attributes {dimension_semantics = [#tpu.dimension_semantics<arbitrary>], iteration_bounds = array<i64: 1>, scalar_prefetch = 0 : i64, scratch_operands = 0 : i64, tpu.core_type = #tpu.core_type<tc>, window_params = [{transform_indices = @transform_0, window_bounds = array<i64: 3>}, {pipeline_mode = #tpu.pipeline_mode<synchronous>, transform_indices = @transform_1, window_bounds = array<i64: 16, 128>}, {pipeline_mode = #tpu.pipeline_mode<synchronous>, transform_indices = @transform_2, window_bounds = array<i64: 128, 128>}, {pipeline_mode = #tpu.pipeline_mode<synchronous>, transform_indices = @transform_3, window_bounds = array<i64: 1, 128>}, {pipeline_mode = #tpu.pipeline_mode<synchronous>, transform_indices = @transform_4, window_bounds = array<i64: 16, 16>}, {pipeline_mode = #tpu.pipeline_mode<synchronous>, transform_indices = @transform_5, window_bounds = array<i64: 16, 128>}]} {
    %c0 = arith.constant 0 : index
    %0 = memref.load %arg1[%c0] : memref<3xf32, #tpu.memory_space<smem>>
    %c1 = arith.constant 1 : index
    %1 = memref.load %arg1[%c1] : memref<3xf32, #tpu.memory_space<smem>>
    %c2 = arith.constant 2 : index
    %2 = memref.load %arg1[%c2] : memref<3xf32, #tpu.memory_space<smem>>
    %3 = math.sqrt %0 : f32
    %4 = math.sqrt %1 : f32
    %c0_0 = arith.constant 0 : index
    %c0_1 = arith.constant 0 : index
    %5 = vector.load %arg2[%c0_0, %c0_1] : memref<16x128xf32, #tpu.memory_space<vmem>>, vector<16x128xf32>
    %c0_2 = arith.constant 0 : index
    %c0_3 = arith.constant 0 : index
    %6 = vector.load %arg3[%c0_2, %c0_3] : memref<128x128xf32, #tpu.memory_space<vmem>>, vector<128x128xf32>
    %c0_4 = arith.constant 0 : index
    %c0_5 = arith.constant 0 : index
    %7 = vector.load %arg4[%c0_4, %c0_5] : memref<1x128xf32, #tpu.memory_space<vmem>>, vector<1x128xf32>
    %8 = arith.mulf %5, %5 : vector<16x128xf32>
    %cst = arith.constant dense<0.000000e+00> : vector<16xf32>
    %9 = vector.multi_reduction <add>, %8, %cst [1] : vector<16x128xf32> to vector<16xf32>
    %10 = vector.shape_cast %9 : vector<16xf32> to vector<16x1xf32>
    %11 = math.sqrt %10 : vector<16x1xf32>
    %cst_6 = arith.constant 1.000000e-15 : f32
    %12 = vector.broadcast %cst_6 : f32 to vector<16x1xf32>
    %13 = arith.maximumf %11, %12 : vector<16x1xf32>
    %cst_7 = arith.constant dense<0.000000e+00> : vector<16x128xf32>
    %14 = tpu.matmul %5, %6, %cst_7 {dimension_numbers = #tpu.dot_dimension_numbers<[1], [0], [0], [1], [0, 0, 1, 1], [], []>} : vector<16x128xf32>, vector<128x128xf32>, vector<16x128xf32> -> vector<16x128xf32>
    %15 = arith.mulf %14, %14 : vector<16x128xf32>
    %cst_8 = arith.constant dense<0.000000e+00> : vector<16xf32>
    %16 = vector.multi_reduction <add>, %15, %cst_8 [1] : vector<16x128xf32> to vector<16xf32>
    %17 = vector.shape_cast %16 : vector<16xf32> to vector<16x1xf32>
    %18 = math.sqrt %17 : vector<16x1xf32>
    %cst_9 = arith.constant 1.000000e-15 : f32
    %19 = vector.broadcast %cst_9 : f32 to vector<16x1xf32>
    %20 = arith.maximumf %18, %19 : vector<16x1xf32>
    %21 = arith.divf %20, %13 : vector<16x1xf32>
    %22 = vector.broadcast %3 : f32 to vector<16x1xf32>
    %23 = arith.mulf %22, %13 : vector<16x1xf32>
    %cst_10 = arith.constant -0.99999988 : f32
    %cst_11 = arith.constant 0.99999988 : f32
    %24 = vector.broadcast %cst_10 : f32 to vector<16x1xf32>
    %25 = arith.maximumf %24, %23 : vector<16x1xf32>
    %26 = vector.broadcast %cst_11 : f32 to vector<16x1xf32>
    %27 = arith.minimumf %26, %25 : vector<16x1xf32>
    %cst_12 = arith.constant 1.000000e+00 : f32
    %28 = vector.broadcast %cst_12 : f32 to vector<16x1xf32>
    %29 = arith.addf %28, %27 : vector<16x1xf32>
    %cst_13 = arith.constant 1.000000e+00 : f32
    %30 = vector.broadcast %cst_13 : f32 to vector<16x1xf32>
    %31 = arith.subf %30, %27 : vector<16x1xf32>
    %32 = arith.divf %29, %31 : vector<16x1xf32>
    %33 = math.log %32 : vector<16x1xf32>
    %cst_14 = arith.constant 5.000000e-01 : f32
    %34 = vector.broadcast %cst_14 : f32 to vector<16x1xf32>
    %35 = arith.mulf %34, %33 : vector<16x1xf32>
    %36 = arith.mulf %21, %35 : vector<16x1xf32>
    %37 = math.tanh %36 : vector<16x1xf32>
    %cst_15 = arith.constant 0.995999991 : f32
    %38 = vector.broadcast %cst_15 : f32 to vector<16x1xf32>
    %39 = arith.minimumf %37, %38 : vector<16x1xf32>
    %40 = vector.broadcast %3 : f32 to vector<16x1xf32>
    %41 = arith.mulf %20, %40 : vector<16x1xf32>
    %42 = arith.divf %39, %41 : vector<16x1xf32>
    %43 = vector.broadcast %42 : vector<16x1xf32> to vector<16x128xf32>
    %44 = arith.mulf %14, %43 : vector<16x128xf32>
    %cst_16 = arith.constant 0.000000e+00 : f32
    %45 = vector.broadcast %cst_16 : f32 to vector<16x1xf32>
    %46 = arith.cmpf oeq, %17, %45 : vector<16x1xf32>
    %cst_17 = arith.constant 0.000000e+00 : f32
    %47 = vector.shape_cast %46 : vector<16x1xi1> to vector<16x1xi1>
    %48 = vector.broadcast %47 : vector<16x1xi1> to vector<16x128xi1>
    %49 = vector.broadcast %cst_17 : f32 to vector<16x128xf32>
    %50 = arith.select %48, %49, %44 : vector<16x128xi1>, vector<16x128xf32>
    %51 = arith.mulf %50, %50 : vector<16x128xf32>
    %cst_18 = arith.constant dense<0.000000e+00> : vector<16xf32>
    %52 = vector.multi_reduction <add>, %51, %cst_18 [1] : vector<16x128xf32> to vector<16xf32>
    %53 = vector.shape_cast %52 : vector<16xf32> to vector<16x1xf32>
    %54 = vector.broadcast %7 : vector<1x128xf32> to vector<16x128xf32>
    %55 = arith.mulf %50, %54 : vector<16x128xf32>
    %cst_19 = arith.constant dense<0.000000e+00> : vector<16xf32>
    %56 = vector.multi_reduction <add>, %55, %cst_19 [1] : vector<16x128xf32> to vector<16xf32>
    %57 = vector.shape_cast %56 : vector<16xf32> to vector<16x1xf32>
    %cst_20 = arith.constant 2.000000e+00 : f32
    %58 = arith.mulf %cst_20, %0 : f32
    %59 = vector.broadcast %58 : f32 to vector<16x1xf32>
    %60 = arith.mulf %59, %57 : vector<16x1xf32>
    %cst_21 = arith.constant 1.000000e+00 : f32
    %61 = vector.broadcast %cst_21 : f32 to vector<16x1xf32>
    %62 = arith.addf %61, %60 : vector<16x1xf32>
    %63 = arith.mulf %0, %2 : f32
    %64 = vector.broadcast %63 : f32 to vector<16x1xf32>
    %65 = arith.addf %62, %64 : vector<16x1xf32>
    %66 = vector.broadcast %65 : vector<16x1xf32> to vector<16x128xf32>
    %67 = arith.mulf %66, %50 : vector<16x128xf32>
    %68 = vector.broadcast %0 : f32 to vector<16x1xf32>
    %69 = arith.mulf %68, %53 : vector<16x1xf32>
    %cst_22 = arith.constant 1.000000e+00 : f32
    %70 = vector.broadcast %cst_22 : f32 to vector<16x1xf32>
    %71 = arith.subf %70, %69 : vector<16x1xf32>
    %72 = vector.broadcast %71 : vector<16x1xf32> to vector<16x128xf32>
    %73 = vector.broadcast %7 : vector<1x128xf32> to vector<16x128xf32>
    %74 = arith.mulf %72, %73 : vector<16x128xf32>
    %75 = arith.addf %67, %74 : vector<16x128xf32>
    %cst_23 = arith.constant 2.000000e+00 : f32
    %76 = arith.mulf %cst_23, %0 : f32
    %77 = vector.broadcast %76 : f32 to vector<16x1xf32>
    %78 = arith.mulf %77, %57 : vector<16x1xf32>
    %cst_24 = arith.constant 1.000000e+00 : f32
    %79 = vector.broadcast %cst_24 : f32 to vector<16x1xf32>
    %80 = arith.addf %79, %78 : vector<16x1xf32>
    %81 = arith.mulf %0, %0 : f32
    %82 = vector.broadcast %81 : f32 to vector<16x1xf32>
    %83 = arith.mulf %82, %53 : vector<16x1xf32>
    %84 = vector.broadcast %2 : f32 to vector<16x1xf32>
    %85 = arith.mulf %83, %84 : vector<16x1xf32>
    %86 = arith.addf %80, %85 : vector<16x1xf32>
    %cst_25 = arith.constant 1.000000e-15 : f32
    %87 = vector.broadcast %cst_25 : f32 to vector<16x1xf32>
    %88 = arith.maximumf %86, %87 : vector<16x1xf32>
    %89 = vector.broadcast %88 : vector<16x1xf32> to vector<16x128xf32>
    %90 = arith.divf %75, %89 : vector<16x128xf32>
    %91 = arith.mulf %90, %90 : vector<16x128xf32>
    %cst_26 = arith.constant dense<0.000000e+00> : vector<16xf32>
    %92 = vector.multi_reduction <add>, %91, %cst_26 [1] : vector<16x128xf32> to vector<16xf32>
    %93 = vector.shape_cast %92 : vector<16xf32> to vector<16x1xf32>
    %cst_27 = arith.constant 0.000000e+00 : f32
    %94 = vector.broadcast %cst_27 : f32 to vector<16x1xf32>
    %95 = arith.maximumf %93, %94 : vector<16x1xf32>
    %96 = math.sqrt %95 : vector<16x1xf32>
    %cst_28 = arith.constant 1.000000e-15 : f32
    %97 = vector.broadcast %cst_28 : f32 to vector<16x1xf32>
    %98 = arith.maximumf %96, %97 : vector<16x1xf32>
    %cst_29 = arith.constant 0.995999991 : f32
    %99 = arith.divf %cst_29, %3 : f32
    %100 = vector.broadcast %99 : f32 to vector<16x1xf32>
    %101 = arith.minimumf %98, %100 : vector<16x1xf32>
    %102 = vector.broadcast %3 : f32 to vector<16x1xf32>
    %103 = arith.mulf %102, %101 : vector<16x1xf32>
    %cst_30 = arith.constant -0.99999988 : f32
    %cst_31 = arith.constant 0.99999988 : f32
    %104 = vector.broadcast %cst_30 : f32 to vector<16x1xf32>
    %105 = arith.maximumf %104, %103 : vector<16x1xf32>
    %106 = vector.broadcast %cst_31 : f32 to vector<16x1xf32>
    %107 = arith.minimumf %106, %105 : vector<16x1xf32>
    %cst_32 = arith.constant 1.000000e+00 : f32
    %108 = vector.broadcast %cst_32 : f32 to vector<16x1xf32>
    %109 = arith.addf %108, %107 : vector<16x1xf32>
    %cst_33 = arith.constant 1.000000e+00 : f32
    %110 = vector.broadcast %cst_33 : f32 to vector<16x1xf32>
    %111 = arith.subf %110, %107 : vector<16x1xf32>
    %112 = arith.divf %109, %111 : vector<16x1xf32>
    %113 = math.log %112 : vector<16x1xf32>
    %cst_34 = arith.constant 5.000000e-01 : f32
    %114 = vector.broadcast %cst_34 : f32 to vector<16x1xf32>
    %115 = arith.mulf %114, %113 : vector<16x1xf32>
    %116 = vector.broadcast %3 : f32 to vector<16x1xf32>
    %117 = arith.mulf %116, %98 : vector<16x1xf32>
    %118 = arith.divf %115, %117 : vector<16x1xf32>
    %119 = vector.broadcast %118 : vector<16x1xf32> to vector<16x128xf32>
    %120 = arith.mulf %90, %119 : vector<16x128xf32>
    %c0_35 = arith.constant 0 : index
    %c0_36 = arith.constant 0 : index
    %121 = vector.load %arg5[%c0_35, %c0_36] : memref<16x16xbf16, #tpu.memory_space<vmem>>, vector<16x16xbf16>
    %122 = arith.truncf %120 : vector<16x128xf32> to vector<16x128xbf16>
    %cst_37 = arith.constant dense<0.000000e+00> : vector<16x128xf32>
    %123 = tpu.matmul %121, %122, %cst_37 {dimension_numbers = #tpu.dot_dimension_numbers<[1], [0], [0], [1], [0, 0, 1, 1], [], []>} : vector<16x16xbf16>, vector<16x128xbf16>, vector<16x128xf32> -> vector<16x128xf32>
    %124 = math.sqrt %0 : f32
    %125 = math.sqrt %1 : f32
    %126 = arith.mulf %123, %123 : vector<16x128xf32>
    %cst_38 = arith.constant dense<0.000000e+00> : vector<16xf32>
    %127 = vector.multi_reduction <add>, %126, %cst_38 [1] : vector<16x128xf32> to vector<16xf32>
    %128 = vector.shape_cast %127 : vector<16xf32> to vector<16x1xf32>
    %cst_39 = arith.constant 0.000000e+00 : f32
    %129 = vector.broadcast %cst_39 : f32 to vector<16x1xf32>
    %130 = arith.maximumf %128, %129 : vector<16x1xf32>
    %131 = math.sqrt %130 : vector<16x1xf32>
    %cst_40 = arith.constant 1.000000e-15 : f32
    %132 = vector.broadcast %cst_40 : f32 to vector<16x1xf32>
    %133 = arith.maximumf %131, %132 : vector<16x1xf32>
    %cst_41 = arith.constant 3.10630298 : f32
    %134 = arith.divf %cst_41, %124 : f32
    %135 = vector.broadcast %134 : f32 to vector<16x1xf32>
    %136 = arith.cmpf ogt, %133, %135 : vector<16x1xf32>
    %137 = vector.broadcast %134 : f32 to vector<16x1xf32>
    %138 = arith.divf %137, %133 : vector<16x1xf32>
    %139 = vector.broadcast %138 : vector<16x1xf32> to vector<16x128xf32>
    %140 = arith.mulf %123, %139 : vector<16x128xf32>
    %141 = vector.shape_cast %136 : vector<16x1xi1> to vector<16x1xi1>
    %142 = vector.broadcast %141 : vector<16x1xi1> to vector<16x128xi1>
    %143 = arith.select %142, %140, %123 : vector<16x128xi1>, vector<16x128xf32>
    %144 = math.tanh %143 : vector<16x128xf32>
    %145 = arith.mulf %144, %144 : vector<16x128xf32>
    %cst_42 = arith.constant dense<0.000000e+00> : vector<16xf32>
    %146 = vector.multi_reduction <add>, %145, %cst_42 [1] : vector<16x128xf32> to vector<16xf32>
    %147 = vector.shape_cast %146 : vector<16xf32> to vector<16x1xf32>
    %cst_43 = arith.constant 0.000000e+00 : f32
    %148 = vector.broadcast %cst_43 : f32 to vector<16x1xf32>
    %149 = arith.maximumf %147, %148 : vector<16x1xf32>
    %150 = math.sqrt %149 : vector<16x1xf32>
    %cst_44 = arith.constant 1.000000e-15 : f32
    %151 = vector.broadcast %cst_44 : f32 to vector<16x1xf32>
    %152 = arith.maximumf %150, %151 : vector<16x1xf32>
    %153 = vector.broadcast %125 : f32 to vector<16x1xf32>
    %154 = arith.mulf %153, %152 : vector<16x1xf32>
    %155 = math.tanh %154 : vector<16x1xf32>
    %cst_45 = arith.constant 0.995999991 : f32
    %156 = vector.broadcast %cst_45 : f32 to vector<16x1xf32>
    %157 = arith.minimumf %155, %156 : vector<16x1xf32>
    %158 = vector.broadcast %125 : f32 to vector<16x1xf32>
    %159 = arith.mulf %158, %152 : vector<16x1xf32>
    %160 = arith.divf %157, %159 : vector<16x1xf32>
    %161 = vector.broadcast %160 : vector<16x1xf32> to vector<16x128xf32>
    %162 = arith.mulf %144, %161 : vector<16x128xf32>
    %163 = arith.mulf %5, %5 : vector<16x128xf32>
    %cst_46 = arith.constant dense<0.000000e+00> : vector<16xf32>
    %164 = vector.multi_reduction <add>, %163, %cst_46 [1] : vector<16x128xf32> to vector<16xf32>
    %165 = vector.shape_cast %164 : vector<16xf32> to vector<16x1xf32>
    %cst_47 = arith.constant 0.000000e+00 : f32
    %166 = vector.broadcast %cst_47 : f32 to vector<16x1xf32>
    %167 = arith.maximumf %165, %166 : vector<16x1xf32>
    %168 = math.sqrt %167 : vector<16x1xf32>
    %cst_48 = arith.constant 1.000000e-15 : f32
    %169 = vector.broadcast %cst_48 : f32 to vector<16x1xf32>
    %170 = arith.maximumf %168, %169 : vector<16x1xf32>
    %171 = arith.divf %4, %3 : f32
    %172 = vector.broadcast %3 : f32 to vector<16x1xf32>
    %173 = arith.mulf %172, %170 : vector<16x1xf32>
    %cst_49 = arith.constant -0.99999988 : f32
    %cst_50 = arith.constant 0.99999988 : f32
    %174 = vector.broadcast %cst_49 : f32 to vector<16x1xf32>
    %175 = arith.maximumf %174, %173 : vector<16x1xf32>
    %176 = vector.broadcast %cst_50 : f32 to vector<16x1xf32>
    %177 = arith.minimumf %176, %175 : vector<16x1xf32>
    %cst_51 = arith.constant 1.000000e+00 : f32
    %178 = vector.broadcast %cst_51 : f32 to vector<16x1xf32>
    %179 = arith.addf %178, %177 : vector<16x1xf32>
    %cst_52 = arith.constant 1.000000e+00 : f32
    %180 = vector.broadcast %cst_52 : f32 to vector<16x1xf32>
    %181 = arith.subf %180, %177 : vector<16x1xf32>
    %182 = arith.divf %179, %181 : vector<16x1xf32>
    %183 = math.log %182 : vector<16x1xf32>
    %cst_53 = arith.constant 5.000000e-01 : f32
    %184 = vector.broadcast %cst_53 : f32 to vector<16x1xf32>
    %185 = arith.mulf %184, %183 : vector<16x1xf32>
    %186 = vector.broadcast %171 : f32 to vector<16x1xf32>
    %187 = arith.mulf %186, %185 : vector<16x1xf32>
    %188 = math.tanh %187 : vector<16x1xf32>
    %cst_54 = arith.constant 0.995999991 : f32
    %189 = vector.broadcast %cst_54 : f32 to vector<16x1xf32>
    %190 = arith.minimumf %188, %189 : vector<16x1xf32>
    %191 = vector.broadcast %4 : f32 to vector<16x1xf32>
    %192 = arith.mulf %191, %170 : vector<16x1xf32>
    %193 = arith.divf %190, %192 : vector<16x1xf32>
    %194 = vector.broadcast %193 : vector<16x1xf32> to vector<16x128xf32>
    %195 = arith.mulf %5, %194 : vector<16x128xf32>
    %cst_55 = arith.constant 0.000000e+00 : f32
    %196 = vector.broadcast %cst_55 : f32 to vector<16x128xf32>
    %197 = arith.subf %196, %195 : vector<16x128xf32>
    %198 = arith.mulf %197, %197 : vector<16x128xf32>
    %cst_56 = arith.constant dense<0.000000e+00> : vector<16xf32>
    %199 = vector.multi_reduction <add>, %198, %cst_56 [1] : vector<16x128xf32> to vector<16xf32>
    %200 = vector.shape_cast %199 : vector<16xf32> to vector<16x1xf32>
    %201 = arith.mulf %162, %162 : vector<16x128xf32>
    %cst_57 = arith.constant dense<0.000000e+00> : vector<16xf32>
    %202 = vector.multi_reduction <add>, %201, %cst_57 [1] : vector<16x128xf32> to vector<16xf32>
    %203 = vector.shape_cast %202 : vector<16xf32> to vector<16x1xf32>
    %204 = arith.mulf %197, %162 : vector<16x128xf32>
    %cst_58 = arith.constant dense<0.000000e+00> : vector<16xf32>
    %205 = vector.multi_reduction <add>, %204, %cst_58 [1] : vector<16x128xf32> to vector<16xf32>
    %206 = vector.shape_cast %205 : vector<16xf32> to vector<16x1xf32>
    %cst_59 = arith.constant 2.000000e+00 : f32
    %207 = arith.mulf %cst_59, %1 : f32
    %208 = vector.broadcast %207 : f32 to vector<16x1xf32>
    %209 = arith.mulf %208, %206 : vector<16x1xf32>
    %cst_60 = arith.constant 1.000000e+00 : f32
    %210 = vector.broadcast %cst_60 : f32 to vector<16x1xf32>
    %211 = arith.addf %210, %209 : vector<16x1xf32>
    %212 = vector.broadcast %1 : f32 to vector<16x1xf32>
    %213 = arith.mulf %212, %203 : vector<16x1xf32>
    %214 = arith.addf %211, %213 : vector<16x1xf32>
    %215 = vector.broadcast %214 : vector<16x1xf32> to vector<16x128xf32>
    %216 = arith.mulf %215, %197 : vector<16x128xf32>
    %217 = vector.broadcast %1 : f32 to vector<16x1xf32>
    %218 = arith.mulf %217, %200 : vector<16x1xf32>
    %cst_61 = arith.constant 1.000000e+00 : f32
    %219 = vector.broadcast %cst_61 : f32 to vector<16x1xf32>
    %220 = arith.subf %219, %218 : vector<16x1xf32>
    %221 = vector.broadcast %220 : vector<16x1xf32> to vector<16x128xf32>
    %222 = arith.mulf %221, %162 : vector<16x128xf32>
    %223 = arith.addf %216, %222 : vector<16x128xf32>
    %cst_62 = arith.constant 2.000000e+00 : f32
    %224 = arith.mulf %cst_62, %1 : f32
    %225 = vector.broadcast %224 : f32 to vector<16x1xf32>
    %226 = arith.mulf %225, %206 : vector<16x1xf32>
    %cst_63 = arith.constant 1.000000e+00 : f32
    %227 = vector.broadcast %cst_63 : f32 to vector<16x1xf32>
    %228 = arith.addf %227, %226 : vector<16x1xf32>
    %229 = arith.mulf %1, %1 : f32
    %230 = vector.broadcast %229 : f32 to vector<16x1xf32>
    %231 = arith.mulf %230, %200 : vector<16x1xf32>
    %232 = arith.mulf %231, %203 : vector<16x1xf32>
    %233 = arith.addf %228, %232 : vector<16x1xf32>
    %cst_64 = arith.constant 1.000000e-15 : f32
    %234 = vector.broadcast %cst_64 : f32 to vector<16x1xf32>
    %235 = arith.maximumf %233, %234 : vector<16x1xf32>
    %236 = vector.broadcast %235 : vector<16x1xf32> to vector<16x128xf32>
    %237 = arith.divf %223, %236 : vector<16x128xf32>
    %238 = arith.mulf %237, %237 : vector<16x128xf32>
    %cst_65 = arith.constant dense<0.000000e+00> : vector<16xf32>
    %239 = vector.multi_reduction <add>, %238, %cst_65 [1] : vector<16x128xf32> to vector<16xf32>
    %240 = vector.shape_cast %239 : vector<16xf32> to vector<16x1xf32>
    %cst_66 = arith.constant 0.000000e+00 : f32
    %241 = vector.broadcast %cst_66 : f32 to vector<16x1xf32>
    %242 = arith.maximumf %240, %241 : vector<16x1xf32>
    %243 = math.sqrt %242 : vector<16x1xf32>
    %cst_67 = arith.constant 1.000000e-15 : f32
    %244 = vector.broadcast %cst_67 : f32 to vector<16x1xf32>
    %245 = arith.maximumf %243, %244 : vector<16x1xf32>
    %246 = vector.broadcast %4 : f32 to vector<16x1xf32>
    %247 = arith.mulf %246, %245 : vector<16x1xf32>
    %cst_68 = arith.constant -0.99999988 : f32
    %cst_69 = arith.constant 0.99999988 : f32
    %248 = vector.broadcast %cst_68 : f32 to vector<16x1xf32>
    %249 = arith.maximumf %248, %247 : vector<16x1xf32>
    %250 = vector.broadcast %cst_69 : f32 to vector<16x1xf32>
    %251 = arith.minimumf %250, %249 : vector<16x1xf32>
    %cst_70 = arith.constant 1.000000e+00 : f32
    %252 = vector.broadcast %cst_70 : f32 to vector<16x1xf32>
    %253 = arith.addf %252, %251 : vector<16x1xf32>
    %cst_71 = arith.constant 1.000000e+00 : f32
    %254 = vector.broadcast %cst_71 : f32 to vector<16x1xf32>
    %255 = arith.subf %254, %251 : vector<16x1xf32>
    %256 = arith.divf %253, %255 : vector<16x1xf32>
    %257 = math.log %256 : vector<16x1xf32>
    %cst_72 = arith.constant 5.000000e-01 : f32
    %258 = vector.broadcast %cst_72 : f32 to vector<16x1xf32>
    %259 = arith.mulf %258, %257 : vector<16x1xf32>
    %cst_73 = arith.constant 5.000000e-01 : f32
    %260 = vector.broadcast %cst_73 : f32 to vector<16x1xf32>
    %261 = arith.mulf %260, %259 : vector<16x1xf32>
    %262 = math.tanh %261 : vector<16x1xf32>
    %263 = vector.broadcast %4 : f32 to vector<16x1xf32>
    %264 = arith.mulf %263, %245 : vector<16x1xf32>
    %265 = arith.divf %262, %264 : vector<16x1xf32>
    %266 = vector.broadcast %265 : vector<16x1xf32> to vector<16x128xf32>
    %267 = arith.mulf %237, %266 : vector<16x128xf32>
    %268 = arith.mulf %195, %195 : vector<16x128xf32>
    %cst_74 = arith.constant dense<0.000000e+00> : vector<16xf32>
    %269 = vector.multi_reduction <add>, %268, %cst_74 [1] : vector<16x128xf32> to vector<16xf32>
    %270 = vector.shape_cast %269 : vector<16xf32> to vector<16x1xf32>
    %271 = arith.mulf %267, %267 : vector<16x128xf32>
    %cst_75 = arith.constant dense<0.000000e+00> : vector<16xf32>
    %272 = vector.multi_reduction <add>, %271, %cst_75 [1] : vector<16x128xf32> to vector<16xf32>
    %273 = vector.shape_cast %272 : vector<16xf32> to vector<16x1xf32>
    %274 = arith.mulf %195, %267 : vector<16x128xf32>
    %cst_76 = arith.constant dense<0.000000e+00> : vector<16xf32>
    %275 = vector.multi_reduction <add>, %274, %cst_76 [1] : vector<16x128xf32> to vector<16xf32>
    %276 = vector.shape_cast %275 : vector<16xf32> to vector<16x1xf32>
    %cst_77 = arith.constant 2.000000e+00 : f32
    %277 = arith.mulf %cst_77, %1 : f32
    %278 = vector.broadcast %277 : f32 to vector<16x1xf32>
    %279 = arith.mulf %278, %276 : vector<16x1xf32>
    %cst_78 = arith.constant 1.000000e+00 : f32
    %280 = vector.broadcast %cst_78 : f32 to vector<16x1xf32>
    %281 = arith.addf %280, %279 : vector<16x1xf32>
    %282 = vector.broadcast %1 : f32 to vector<16x1xf32>
    %283 = arith.mulf %282, %273 : vector<16x1xf32>
    %284 = arith.addf %281, %283 : vector<16x1xf32>
    %285 = vector.broadcast %284 : vector<16x1xf32> to vector<16x128xf32>
    %286 = arith.mulf %285, %195 : vector<16x128xf32>
    %287 = vector.broadcast %1 : f32 to vector<16x1xf32>
    %288 = arith.mulf %287, %270 : vector<16x1xf32>
    %cst_79 = arith.constant 1.000000e+00 : f32
    %289 = vector.broadcast %cst_79 : f32 to vector<16x1xf32>
    %290 = arith.subf %289, %288 : vector<16x1xf32>
    %291 = vector.broadcast %290 : vector<16x1xf32> to vector<16x128xf32>
    %292 = arith.mulf %291, %267 : vector<16x128xf32>
    %293 = arith.addf %286, %292 : vector<16x128xf32>
    %cst_80 = arith.constant 2.000000e+00 : f32
    %294 = arith.mulf %cst_80, %1 : f32
    %295 = vector.broadcast %294 : f32 to vector<16x1xf32>
    %296 = arith.mulf %295, %276 : vector<16x1xf32>
    %cst_81 = arith.constant 1.000000e+00 : f32
    %297 = vector.broadcast %cst_81 : f32 to vector<16x1xf32>
    %298 = arith.addf %297, %296 : vector<16x1xf32>
    %299 = arith.mulf %1, %1 : f32
    %300 = vector.broadcast %299 : f32 to vector<16x1xf32>
    %301 = arith.mulf %300, %270 : vector<16x1xf32>
    %302 = arith.mulf %301, %273 : vector<16x1xf32>
    %303 = arith.addf %298, %302 : vector<16x1xf32>
    %cst_82 = arith.constant 1.000000e-15 : f32
    %304 = vector.broadcast %cst_82 : f32 to vector<16x1xf32>
    %305 = arith.maximumf %303, %304 : vector<16x1xf32>
    %306 = vector.broadcast %305 : vector<16x1xf32> to vector<16x128xf32>
    %307 = arith.divf %293, %306 : vector<16x128xf32>
    %308 = arith.mulf %307, %307 : vector<16x128xf32>
    %cst_83 = arith.constant dense<0.000000e+00> : vector<16xf32>
    %309 = vector.multi_reduction <add>, %308, %cst_83 [1] : vector<16x128xf32> to vector<16xf32>
    %310 = vector.shape_cast %309 : vector<16xf32> to vector<16x1xf32>
    %cst_84 = arith.constant 0.000000e+00 : f32
    %311 = vector.broadcast %cst_84 : f32 to vector<16x1xf32>
    %312 = arith.maximumf %310, %311 : vector<16x1xf32>
    %313 = math.sqrt %312 : vector<16x1xf32>
    %cst_85 = arith.constant 1.000000e-15 : f32
    %314 = vector.broadcast %cst_85 : f32 to vector<16x1xf32>
    %315 = arith.maximumf %313, %314 : vector<16x1xf32>
    %cst_86 = arith.constant 0.995999991 : f32
    %316 = arith.divf %cst_86, %4 : f32
    %317 = vector.broadcast %316 : f32 to vector<16x1xf32>
    %318 = arith.cmpf ogt, %315, %317 : vector<16x1xf32>
    %319 = vector.broadcast %316 : f32 to vector<16x1xf32>
    %320 = arith.divf %319, %315 : vector<16x1xf32>
    %321 = vector.broadcast %320 : vector<16x1xf32> to vector<16x128xf32>
    %322 = arith.mulf %307, %321 : vector<16x128xf32>
    %323 = vector.shape_cast %318 : vector<16x1xi1> to vector<16x1xi1>
    %324 = vector.broadcast %323 : vector<16x1xi1> to vector<16x128xi1>
    %325 = arith.select %324, %322, %307 : vector<16x128xi1>, vector<16x128xf32>
    %c0_87 = arith.constant 0 : index
    %c0_88 = arith.constant 0 : index
    %326 = vector.load %arg6[%c0_87, %c0_88] : memref<16x128xf32, #tpu.memory_space<vmem>>, vector<16x128xf32>
    tpu.vector_store %arg6[%c0_87, %c0_88], %325 {strides = array<i32>} : memref<16x128xf32, #tpu.memory_space<vmem>>, vector<16x128xf32>,
    return
  }
  func.func @transform_0(%arg0: i32) -> i32 {
    %c0_i32 = arith.constant 0 : i32
    %c0_i32_0 = arith.constant 0 : i32
    return %c0_i32 : i32
  }
  func.func @transform_1(%arg0: i32) -> (i32, i32) {
    %c0_i32 = arith.constant 0 : i32
    %c0_i32_0 = arith.constant 0 : i32
    %c0_i32_1 = arith.constant 0 : i32
    return %c0_i32, %c0_i32_0 : i32, i32
  }
  func.func @transform_2(%arg0: i32) -> (i32, i32) {
    %c0_i32 = arith.constant 0 : i32
    %c0_i32_0 = arith.constant 0 : i32
    %c0_i32_1 = arith.constant 0 : i32
    return %c0_i32, %c0_i32_0 : i32, i32
  }
  func.func @transform_3(%arg0: i32) -> (i32, i32) {
    %c0_i32 = arith.constant 0 : i32
    %c0_i32_0 = arith.constant 0 : i32
    %c0_i32_1 = arith.constant 0 : i32
    return %c0_i32, %c0_i32_0 : i32, i32
  }
  func.func @transform_4(%arg0: i32) -> (i32, i32) {
    %c0_i32 = arith.constant 0 : i32
    %c0_i32_0 = arith.constant 0 : i32
    %c0_i32_1 = arith.constant 0 : i32
    return %c0_i32, %c0_i32_0 : i32, i32
  }
  func.func @transform_5(%arg0: i32) -> (i32, i32) {
    %c0_i32 = arith.constant 0 : i32
    %c0_i32_0 = arith.constant 0 : i32
    %c0_i32_1 = arith.constant 0 : i32
    return %c0_i32, %c0_i32_0 : i32, i32
  }
}

module attributes {stable_mosaic.version = 11 : i64} {
  func.func @_fused_layer_kernel(%arg0: i32, %arg1: memref<3xf32, #tpu.memory_space<smem>>, %arg2: memref<16x128xf32, #tpu.memory_space<vmem>>, %arg3: memref<128x128xf32, #tpu.memory_space<vmem>>, %arg4: memref<1x128xf32, #tpu.memory_space<vmem>>, %arg5: memref<16x16xbf16, #tpu.memory_space<vmem>>, %arg6: memref<16x128xf32, #tpu.memory_space<vmem>>) attributes {dimension_semantics = [#tpu.dimension_semantics<arbitrary>], iteration_bounds = array<i64: 1>, scalar_prefetch = 0 : i64, scratch_operands = 0 : i64, tpu.core_type = #tpu.core_type<tc>, window_params = [{transform_indices = @transform_0, window_bounds = array<i64: 3>}, {pipeline_mode = #tpu.pipeline_mode<synchronous>, transform_indices = @transform_1, window_bounds = array<i64: 16, 128>}, {pipeline_mode = #tpu.pipeline_mode<synchronous>, transform_indices = @transform_2, window_bounds = array<i64: 128, 128>}, {pipeline_mode = #tpu.pipeline_mode<synchronous>, transform_indices = @transform_3, window_bounds = array<i64: 1, 128>}, {pipeline_mode = #tpu.pipeline_mode<synchronous>, transform_indices = @transform_4, window_bounds = array<i64: 16, 16>}, {pipeline_mode = #tpu.pipeline_mode<synchronous>, transform_indices = @transform_5, window_bounds = array<i64: 16, 128>}]} {
    %c0 = arith.constant 0 : index
    %0 = memref.load %arg1[%c0] : memref<3xf32, #tpu.memory_space<smem>>
    %c1 = arith.constant 1 : index
    %1 = memref.load %arg1[%c1] : memref<3xf32, #tpu.memory_space<smem>>
    %c2 = arith.constant 2 : index
    %2 = memref.load %arg1[%c2] : memref<3xf32, #tpu.memory_space<smem>>
    %3 = math.sqrt %0 : f32
    %c0_0 = arith.constant 0 : index
    %c0_1 = arith.constant 0 : index
    %4 = vector.load %arg2[%c0_0, %c0_1] : memref<16x128xf32, #tpu.memory_space<vmem>>, vector<16x128xf32>
    %c0_2 = arith.constant 0 : index
    %c0_3 = arith.constant 0 : index
    %5 = vector.load %arg3[%c0_2, %c0_3] : memref<128x128xf32, #tpu.memory_space<vmem>>, vector<128x128xf32>
    %c0_4 = arith.constant 0 : index
    %c0_5 = arith.constant 0 : index
    %6 = vector.load %arg4[%c0_4, %c0_5] : memref<1x128xf32, #tpu.memory_space<vmem>>, vector<1x128xf32>
    %7 = arith.mulf %4, %4 : vector<16x128xf32>
    %cst = arith.constant dense<0.000000e+00> : vector<16xf32>
    %8 = vector.multi_reduction <add>, %7, %cst [1] : vector<16x128xf32> to vector<16xf32>
    %9 = vector.shape_cast %8 : vector<16xf32> to vector<16x1xf32>
    %cst_6 = arith.constant 0.000000e+00 : f32
    %10 = vector.broadcast %cst_6 : f32 to vector<16x1xf32>
    %11 = arith.maximumf %9, %10 : vector<16x1xf32>
    %12 = math.sqrt %11 : vector<16x1xf32>
    %cst_7 = arith.constant 1.000000e-15 : f32
    %13 = vector.broadcast %cst_7 : f32 to vector<16x1xf32>
    %14 = arith.maximumf %12, %13 : vector<16x1xf32>
    %15 = vector.broadcast %3 : f32 to vector<16x1xf32>
    %16 = arith.mulf %15, %14 : vector<16x1xf32>
    %17 = math.tanh %16 : vector<16x1xf32>
    %cst_8 = arith.constant 0.995999991 : f32
    %18 = vector.broadcast %cst_8 : f32 to vector<16x1xf32>
    %19 = arith.minimumf %17, %18 : vector<16x1xf32>
    %20 = vector.broadcast %3 : f32 to vector<16x1xf32>
    %21 = arith.mulf %20, %14 : vector<16x1xf32>
    %22 = arith.divf %19, %21 : vector<16x1xf32>
    %23 = vector.broadcast %22 : vector<16x1xf32> to vector<16x128xf32>
    %24 = arith.mulf %4, %23 : vector<16x128xf32>
    %25 = arith.mulf %24, %24 : vector<16x128xf32>
    %cst_9 = arith.constant dense<0.000000e+00> : vector<16xf32>
    %26 = vector.multi_reduction <add>, %25, %cst_9 [1] : vector<16x128xf32> to vector<16xf32>
    %27 = vector.shape_cast %26 : vector<16xf32> to vector<16x1xf32>
    %28 = math.sqrt %27 : vector<16x1xf32>
    %cst_10 = arith.constant 1.000000e-15 : f32
    %29 = vector.broadcast %cst_10 : f32 to vector<16x1xf32>
    %30 = arith.maximumf %28, %29 : vector<16x1xf32>
    %cst_11 = arith.constant dense<0.000000e+00> : vector<16x128xf32>
    %31 = tpu.matmul %24, %5, %cst_11 {dimension_numbers = #tpu.dot_dimension_numbers<[1], [0], [0], [1], [0, 0, 1, 1], [], []>} : vector<16x128xf32>, vector<128x128xf32>, vector<16x128xf32> -> vector<16x128xf32>
    %32 = arith.mulf %31, %31 : vector<16x128xf32>
    %cst_12 = arith.constant dense<0.000000e+00> : vector<16xf32>
    %33 = vector.multi_reduction <add>, %32, %cst_12 [1] : vector<16x128xf32> to vector<16xf32>
    %34 = vector.shape_cast %33 : vector<16xf32> to vector<16x1xf32>
    %35 = math.sqrt %34 : vector<16x1xf32>
    %cst_13 = arith.constant 1.000000e-15 : f32
    %36 = vector.broadcast %cst_13 : f32 to vector<16x1xf32>
    %37 = arith.maximumf %35, %36 : vector<16x1xf32>
    %38 = arith.divf %37, %30 : vector<16x1xf32>
    %39 = vector.broadcast %3 : f32 to vector<16x1xf32>
    %40 = arith.mulf %39, %30 : vector<16x1xf32>
    %cst_14 = arith.constant -0.99999988 : f32
    %cst_15 = arith.constant 0.99999988 : f32
    %41 = vector.broadcast %cst_14 : f32 to vector<16x1xf32>
    %42 = arith.maximumf %41, %40 : vector<16x1xf32>
    %43 = vector.broadcast %cst_15 : f32 to vector<16x1xf32>
    %44 = arith.minimumf %43, %42 : vector<16x1xf32>
    %cst_16 = arith.constant 1.000000e+00 : f32
    %45 = vector.broadcast %cst_16 : f32 to vector<16x1xf32>
    %46 = arith.addf %45, %44 : vector<16x1xf32>
    %cst_17 = arith.constant 1.000000e+00 : f32
    %47 = vector.broadcast %cst_17 : f32 to vector<16x1xf32>
    %48 = arith.subf %47, %44 : vector<16x1xf32>
    %49 = arith.divf %46, %48 : vector<16x1xf32>
    %50 = math.log %49 : vector<16x1xf32>
    %cst_18 = arith.constant 5.000000e-01 : f32
    %51 = vector.broadcast %cst_18 : f32 to vector<16x1xf32>
    %52 = arith.mulf %51, %50 : vector<16x1xf32>
    %53 = arith.mulf %38, %52 : vector<16x1xf32>
    %54 = math.tanh %53 : vector<16x1xf32>
    %cst_19 = arith.constant 0.995999991 : f32
    %55 = vector.broadcast %cst_19 : f32 to vector<16x1xf32>
    %56 = arith.minimumf %54, %55 : vector<16x1xf32>
    %57 = vector.broadcast %3 : f32 to vector<16x1xf32>
    %58 = arith.mulf %37, %57 : vector<16x1xf32>
    %59 = arith.divf %56, %58 : vector<16x1xf32>
    %60 = vector.broadcast %59 : vector<16x1xf32> to vector<16x128xf32>
    %61 = arith.mulf %31, %60 : vector<16x128xf32>
    %cst_20 = arith.constant 0.000000e+00 : f32
    %62 = vector.broadcast %cst_20 : f32 to vector<16x1xf32>
    %63 = arith.cmpf oeq, %34, %62 : vector<16x1xf32>
    %cst_21 = arith.constant 0.000000e+00 : f32
    %64 = vector.shape_cast %63 : vector<16x1xi1> to vector<16x1xi1>
    %65 = vector.broadcast %64 : vector<16x1xi1> to vector<16x128xi1>
    %66 = vector.broadcast %cst_21 : f32 to vector<16x128xf32>
    %67 = arith.select %65, %66, %61 : vector<16x128xi1>, vector<16x128xf32>
    %68 = arith.mulf %67, %67 : vector<16x128xf32>
    %cst_22 = arith.constant dense<0.000000e+00> : vector<16xf32>
    %69 = vector.multi_reduction <add>, %68, %cst_22 [1] : vector<16x128xf32> to vector<16xf32>
    %70 = vector.shape_cast %69 : vector<16xf32> to vector<16x1xf32>
    %71 = vector.broadcast %6 : vector<1x128xf32> to vector<16x128xf32>
    %72 = arith.mulf %67, %71 : vector<16x128xf32>
    %cst_23 = arith.constant dense<0.000000e+00> : vector<16xf32>
    %73 = vector.multi_reduction <add>, %72, %cst_23 [1] : vector<16x128xf32> to vector<16xf32>
    %74 = vector.shape_cast %73 : vector<16xf32> to vector<16x1xf32>
    %cst_24 = arith.constant 2.000000e+00 : f32
    %75 = arith.mulf %cst_24, %0 : f32
    %76 = vector.broadcast %75 : f32 to vector<16x1xf32>
    %77 = arith.mulf %76, %74 : vector<16x1xf32>
    %cst_25 = arith.constant 1.000000e+00 : f32
    %78 = vector.broadcast %cst_25 : f32 to vector<16x1xf32>
    %79 = arith.addf %78, %77 : vector<16x1xf32>
    %80 = arith.mulf %0, %2 : f32
    %81 = vector.broadcast %80 : f32 to vector<16x1xf32>
    %82 = arith.addf %79, %81 : vector<16x1xf32>
    %83 = vector.broadcast %82 : vector<16x1xf32> to vector<16x128xf32>
    %84 = arith.mulf %83, %67 : vector<16x128xf32>
    %85 = vector.broadcast %0 : f32 to vector<16x1xf32>
    %86 = arith.mulf %85, %70 : vector<16x1xf32>
    %cst_26 = arith.constant 1.000000e+00 : f32
    %87 = vector.broadcast %cst_26 : f32 to vector<16x1xf32>
    %88 = arith.subf %87, %86 : vector<16x1xf32>
    %89 = vector.broadcast %88 : vector<16x1xf32> to vector<16x128xf32>
    %90 = vector.broadcast %6 : vector<1x128xf32> to vector<16x128xf32>
    %91 = arith.mulf %89, %90 : vector<16x128xf32>
    %92 = arith.addf %84, %91 : vector<16x128xf32>
    %cst_27 = arith.constant 2.000000e+00 : f32
    %93 = arith.mulf %cst_27, %0 : f32
    %94 = vector.broadcast %93 : f32 to vector<16x1xf32>
    %95 = arith.mulf %94, %74 : vector<16x1xf32>
    %cst_28 = arith.constant 1.000000e+00 : f32
    %96 = vector.broadcast %cst_28 : f32 to vector<16x1xf32>
    %97 = arith.addf %96, %95 : vector<16x1xf32>
    %98 = arith.mulf %0, %0 : f32
    %99 = vector.broadcast %98 : f32 to vector<16x1xf32>
    %100 = arith.mulf %99, %70 : vector<16x1xf32>
    %101 = vector.broadcast %2 : f32 to vector<16x1xf32>
    %102 = arith.mulf %100, %101 : vector<16x1xf32>
    %103 = arith.addf %97, %102 : vector<16x1xf32>
    %cst_29 = arith.constant 1.000000e-15 : f32
    %104 = vector.broadcast %cst_29 : f32 to vector<16x1xf32>
    %105 = arith.maximumf %103, %104 : vector<16x1xf32>
    %106 = vector.broadcast %105 : vector<16x1xf32> to vector<16x128xf32>
    %107 = arith.divf %92, %106 : vector<16x128xf32>
    %108 = arith.mulf %107, %107 : vector<16x128xf32>
    %cst_30 = arith.constant dense<0.000000e+00> : vector<16xf32>
    %109 = vector.multi_reduction <add>, %108, %cst_30 [1] : vector<16x128xf32> to vector<16xf32>
    %110 = vector.shape_cast %109 : vector<16xf32> to vector<16x1xf32>
    %cst_31 = arith.constant 0.000000e+00 : f32
    %111 = vector.broadcast %cst_31 : f32 to vector<16x1xf32>
    %112 = arith.maximumf %110, %111 : vector<16x1xf32>
    %113 = math.sqrt %112 : vector<16x1xf32>
    %cst_32 = arith.constant 1.000000e-15 : f32
    %114 = vector.broadcast %cst_32 : f32 to vector<16x1xf32>
    %115 = arith.maximumf %113, %114 : vector<16x1xf32>
    %cst_33 = arith.constant 0.995999991 : f32
    %116 = arith.divf %cst_33, %3 : f32
    %117 = vector.broadcast %116 : f32 to vector<16x1xf32>
    %118 = arith.minimumf %115, %117 : vector<16x1xf32>
    %119 = vector.broadcast %3 : f32 to vector<16x1xf32>
    %120 = arith.mulf %119, %118 : vector<16x1xf32>
    %cst_34 = arith.constant -0.99999988 : f32
    %cst_35 = arith.constant 0.99999988 : f32
    %121 = vector.broadcast %cst_34 : f32 to vector<16x1xf32>
    %122 = arith.maximumf %121, %120 : vector<16x1xf32>
    %123 = vector.broadcast %cst_35 : f32 to vector<16x1xf32>
    %124 = arith.minimumf %123, %122 : vector<16x1xf32>
    %cst_36 = arith.constant 1.000000e+00 : f32
    %125 = vector.broadcast %cst_36 : f32 to vector<16x1xf32>
    %126 = arith.addf %125, %124 : vector<16x1xf32>
    %cst_37 = arith.constant 1.000000e+00 : f32
    %127 = vector.broadcast %cst_37 : f32 to vector<16x1xf32>
    %128 = arith.subf %127, %124 : vector<16x1xf32>
    %129 = arith.divf %126, %128 : vector<16x1xf32>
    %130 = math.log %129 : vector<16x1xf32>
    %cst_38 = arith.constant 5.000000e-01 : f32
    %131 = vector.broadcast %cst_38 : f32 to vector<16x1xf32>
    %132 = arith.mulf %131, %130 : vector<16x1xf32>
    %133 = vector.broadcast %3 : f32 to vector<16x1xf32>
    %134 = arith.mulf %133, %115 : vector<16x1xf32>
    %135 = arith.divf %132, %134 : vector<16x1xf32>
    %136 = vector.broadcast %135 : vector<16x1xf32> to vector<16x128xf32>
    %137 = arith.mulf %107, %136 : vector<16x128xf32>
    %c0_39 = arith.constant 0 : index
    %c0_40 = arith.constant 0 : index
    %138 = vector.load %arg5[%c0_39, %c0_40] : memref<16x16xbf16, #tpu.memory_space<vmem>>, vector<16x16xbf16>
    %139 = arith.truncf %137 : vector<16x128xf32> to vector<16x128xbf16>
    %cst_41 = arith.constant dense<0.000000e+00> : vector<16x128xf32>
    %140 = tpu.matmul %138, %139, %cst_41 {dimension_numbers = #tpu.dot_dimension_numbers<[1], [0], [0], [1], [0, 0, 1, 1], [], []>} : vector<16x16xbf16>, vector<16x128xbf16>, vector<16x128xf32> -> vector<16x128xf32>
    %141 = math.sqrt %0 : f32
    %142 = math.sqrt %1 : f32
    %143 = arith.mulf %140, %140 : vector<16x128xf32>
    %cst_42 = arith.constant dense<0.000000e+00> : vector<16xf32>
    %144 = vector.multi_reduction <add>, %143, %cst_42 [1] : vector<16x128xf32> to vector<16xf32>
    %145 = vector.shape_cast %144 : vector<16xf32> to vector<16x1xf32>
    %cst_43 = arith.constant 0.000000e+00 : f32
    %146 = vector.broadcast %cst_43 : f32 to vector<16x1xf32>
    %147 = arith.maximumf %145, %146 : vector<16x1xf32>
    %148 = math.sqrt %147 : vector<16x1xf32>
    %cst_44 = arith.constant 1.000000e-15 : f32
    %149 = vector.broadcast %cst_44 : f32 to vector<16x1xf32>
    %150 = arith.maximumf %148, %149 : vector<16x1xf32>
    %cst_45 = arith.constant 3.10630298 : f32
    %151 = arith.divf %cst_45, %141 : f32
    %152 = vector.broadcast %151 : f32 to vector<16x1xf32>
    %153 = arith.cmpf ogt, %150, %152 : vector<16x1xf32>
    %154 = vector.broadcast %151 : f32 to vector<16x1xf32>
    %155 = arith.divf %154, %150 : vector<16x1xf32>
    %156 = vector.broadcast %155 : vector<16x1xf32> to vector<16x128xf32>
    %157 = arith.mulf %140, %156 : vector<16x128xf32>
    %158 = vector.shape_cast %153 : vector<16x1xi1> to vector<16x1xi1>
    %159 = vector.broadcast %158 : vector<16x1xi1> to vector<16x128xi1>
    %160 = arith.select %159, %157, %140 : vector<16x128xi1>, vector<16x128xf32>
    %161 = math.tanh %160 : vector<16x128xf32>
    %162 = arith.mulf %161, %161 : vector<16x128xf32>
    %cst_46 = arith.constant dense<0.000000e+00> : vector<16xf32>
    %163 = vector.multi_reduction <add>, %162, %cst_46 [1] : vector<16x128xf32> to vector<16xf32>
    %164 = vector.shape_cast %163 : vector<16xf32> to vector<16x1xf32>
    %cst_47 = arith.constant 0.000000e+00 : f32
    %165 = vector.broadcast %cst_47 : f32 to vector<16x1xf32>
    %166 = arith.maximumf %164, %165 : vector<16x1xf32>
    %167 = math.sqrt %166 : vector<16x1xf32>
    %cst_48 = arith.constant 1.000000e-15 : f32
    %168 = vector.broadcast %cst_48 : f32 to vector<16x1xf32>
    %169 = arith.maximumf %167, %168 : vector<16x1xf32>
    %170 = vector.broadcast %142 : f32 to vector<16x1xf32>
    %171 = arith.mulf %170, %169 : vector<16x1xf32>
    %172 = math.tanh %171 : vector<16x1xf32>
    %cst_49 = arith.constant 0.995999991 : f32
    %173 = vector.broadcast %cst_49 : f32 to vector<16x1xf32>
    %174 = arith.minimumf %172, %173 : vector<16x1xf32>
    %175 = vector.broadcast %142 : f32 to vector<16x1xf32>
    %176 = arith.mulf %175, %169 : vector<16x1xf32>
    %177 = arith.divf %174, %176 : vector<16x1xf32>
    %178 = vector.broadcast %177 : vector<16x1xf32> to vector<16x128xf32>
    %179 = arith.mulf %161, %178 : vector<16x128xf32>
    %c0_50 = arith.constant 0 : index
    %c0_51 = arith.constant 0 : index
    %180 = vector.load %arg6[%c0_50, %c0_51] : memref<16x128xf32, #tpu.memory_space<vmem>>, vector<16x128xf32>
    tpu.vector_store %arg6[%c0_50, %c0_51], %179 {strides = array<i32>} : memref<16x128xf32, #tpu.memory_space<vmem>>, vector<16x128xf32>,
    return
  }
  func.func @transform_0(%arg0: i32) -> i32 {
    %c0_i32 = arith.constant 0 : i32
    %c0_i32_0 = arith.constant 0 : i32
    return %c0_i32 : i32
  }
  func.func @transform_1(%arg0: i32) -> (i32, i32) {
    %c0_i32 = arith.constant 0 : i32
    %c0_i32_0 = arith.constant 0 : i32
    %c0_i32_1 = arith.constant 0 : i32
    return %c0_i32, %c0_i32_0 : i32, i32
  }
  func.func @transform_2(%arg0: i32) -> (i32, i32) {
    %c0_i32 = arith.constant 0 : i32
    %c0_i32_0 = arith.constant 0 : i32
    %c0_i32_1 = arith.constant 0 : i32
    return %c0_i32, %c0_i32_0 : i32, i32
  }
  func.func @transform_3(%arg0: i32) -> (i32, i32) {
    %c0_i32 = arith.constant 0 : i32
    %c0_i32_0 = arith.constant 0 : i32
    %c0_i32_1 = arith.constant 0 : i32
    return %c0_i32, %c0_i32_0 : i32, i32
  }
  func.func @transform_4(%arg0: i32) -> (i32, i32) {
    %c0_i32 = arith.constant 0 : i32
    %c0_i32_0 = arith.constant 0 : i32
    %c0_i32_1 = arith.constant 0 : i32
    return %c0_i32, %c0_i32_0 : i32, i32
  }
  func.func @transform_5(%arg0: i32) -> (i32, i32) {
    %c0_i32 = arith.constant 0 : i32
    %c0_i32_0 = arith.constant 0 : i32
    %c0_i32_1 = arith.constant 0 : i32
    return %c0_i32, %c0_i32_0 : i32, i32
  }
}

</mosaic_0001>

<llo_original>
// kernel: hgcn_residual_forward.3
$region0: #{hgcn_residual_forward.3}
  #allocation0 [shape = 'u32[]', space=smem, size = 0x4, offset = 0x4, fixed_abs, tag = 'smem constant byte address 0x4 - core index']
  #allocation1 [shape = 'u32[72,128]{1,0:T(1,128)}', space=vmem, size = 0x9000, scoped, tag = 'internal scratch']
  %s0 = inlined_call_operand.vmem [shape: f32[3], index: 0, kind: input, shape index: {}]
  %s1 = inlined_call_operand.vmem [shape: f32[16,128], index: 1, kind: input, shape index: {}]
  %s2 = inlined_call_operand.hbm [shape: f32[128,128], index: 2, kind: input, shape index: {}]
  %s3 = inlined_call_operand.vmem [shape: f32[1,128], index: 3, kind: input, shape index: {}]
  %s4 = inlined_call_operand.vmem [shape: bf16[16,16], index: 4, kind: input, shape index: {}]
  %s5 = inlined_call_operand.hbm [shape: f32[16,128], index: 5, kind: output, shape index: {}]
  %s6 = sld [smem:[#allocation0]]
  $region38: #{hgcn_residual_forward.3} parent=0
    _
  %s8 = ssub.s32 1, %s6
  %s9 = scalar_select 0, %s8, %s6
  $region1: #{hgcn_residual_forward.3} parent=0
    #allocation2 [shape = 'u8[512]{0}', space=smem, size = 0x200, scoped, tag = 'input window, operand 0, single buffered']
    #allocation3 [shape = 's32[1]{0}', space=sflag, size = 0x4, scoped, tag = 'scoped memory for hgcn_residual_forward.3']
    #allocation4 [shape = 's32[1]{0}', space=sflag, size = 0x4, scoped, tag = 'scoped memory for hgcn_residual_forward.3']
    #allocation5 [shape = 's32[1]{0}', space=sflag, size = 0x4, scoped, tag = 'scoped memory for hgcn_residual_forward.3']
    #allocation6 [shape = 'u8[65536]{0}', space=vmem, size = 0x10000, scoped, tag = 'input window, operand 2, single buffered']
    #allocation7 [shape = 'u8[8192]{0}', space=vmem, size = 0x2000, scoped, tag = 'output window, operand 0, single buffered']
    %10 = vsyncpa [#allocation5], 0
    %11 = vsyncpa [#allocation3], 0
    %12 = vsyncpa [#allocation4], 0
    // Predicated region
    $region2: #{hgcn_residual_forward.3} parent=1 // pred_check
      _
    $region3: #{hgcn_residual_forward.3} parent=1 // pred_check_branch
      %14 = sbr.rel (0) target = $region5
    $region4: #{hgcn_residual_forward.3} parent=1 // pred_region
      %16 = vsyncadd [#allocation5], 0
      %s18 = sshll.u32 %s0, 4
      %s19 = int_to_ptr.vmem [resolvable:$true] %s18
      %21 = dma.vmem_to_smem %s19, 16, [#allocation2], [#allocation5]
    $region5: #{hgcn_residual_forward.3} parent=1 // pred_fallthru
      _
    // Predicated region
    $region6: #{hgcn_residual_forward.3} parent=1 // pred_check
      _
    $region7: #{hgcn_residual_forward.3} parent=1 // pred_check_branch
      %23 = sbr.rel (0) target = $region9
    $region8: #{hgcn_residual_forward.3} parent=1 // pred_region
      _
    $region9: #{hgcn_residual_forward.3} parent=1 // pred_fallthru
      _
    // Predicated region
    $region10: #{hgcn_residual_forward.3} parent=1 // pred_check
      _
    $region11: #{hgcn_residual_forward.3} parent=1 // pred_check_branch
      %25 = sbr.rel (0) target = $region13
    $region12: #{hgcn_residual_forward.3} parent=1 // pred_region
      %27 = vsyncadd [#allocation3], 0
      %s28 = sshll.u32 %s2, 4
      %s29 = int_to_ptr.hbm [resolvable:$true] %s28
      %s30 = sshll.u32 [#allocation6], 4
      %s31 = int_to_ptr.vmem [resolvable:$true] %s30
      %36 = dma.hbm_to_vmem [thread:$0]  %s29, 2048, %s31, [#allocation3], 128, 128, 8
    $region13: #{hgcn_residual_forward.3} parent=1 // pred_fallthru
      _
    // Predicated region
    $region14: #{hgcn_residual_forward.3} parent=1 // pred_check
      _
    $region15: #{hgcn_residual_forward.3} parent=1 // pred_check_branch
      %38 = sbr.rel (0) target = $region17
    $region16: #{hgcn_residual_forward.3} parent=1 // pred_region
      _
    $region17: #{hgcn_residual_forward.3} parent=1 // pred_fallthru
      _
    // Predicated region
    $region18: #{hgcn_residual_forward.3} parent=1 // pred_check
      _
    $region19: #{hgcn_residual_forward.3} parent=1 // pred_check_branch
      %40 = sbr.rel (0) target = $region21
    $region20: #{hgcn_residual_forward.3} parent=1 // pred_region
      _
    $region21: #{hgcn_residual_forward.3} parent=1 // pred_fallthru
      _
    // Predicated region
    $region22: #{hgcn_residual_forward.3} parent=1 // pred_check
      _
    $region23: #{hgcn_residual_forward.3} parent=1 // pred_check_branch
      %42 = sbr.rel (0) target = $region25
    $region24: #{hgcn_residual_forward.3} parent=1 // pred_region
      %44 = dma.done [#allocation5], 16
    $region25: #{hgcn_residual_forward.3} parent=1 // pred_fallthru
      _
    // Predicated region
    $region26: #{hgcn_residual_forward.3} parent=1 // pred_check
      _
    $region27: #{hgcn_residual_forward.3} parent=1 // pred_check_branch
      %46 = sbr.rel (0) target = $region29
    $region28: #{hgcn_residual_forward.3} parent=1 // pred_region
      %48 = dma.done [#allocation3], 2048
    $region29: #{hgcn_residual_forward.3} parent=1 // pred_fallthru
      _
    %49 = sfence
    %s51 = sld [smem:[#allocation2]]
    %s52 = sld [smem:[#allocation2 + $0x1]]
    %s53 = sld [smem:[#allocation2 + $0x2]]
    %v54 = vstv %s51
    %v55 = vrsqrt.pop %v54
    %v56 = vmul.f32 %v55, %v54
    %v57 = vmul.f32 %v56, %v55
    %v58 = vmul.f32 0.5, %v57
    %v59 = vsub.f32 1.5, %v58
    %v60 = vmul.f32 %v55, %v59
    %v61 = vmul.f32 %v54, %v60
    %vm62 = vcmp.eq.f32.partialorder %v54, inf
    %v63 = vsel %vm62, %v54, %v61
    %vm64 = vcmp.eq.f32.partialorder %v54, 0.0
    %v65 = vand.u32 %v54, 2147483648
    %v66 = vsel %vm64, %v65, %v63
    %s67 = vtos %v66
    %v68 = vstv %s52
    %v69 = vrsqrt.pop %v68
    %v70 = vmul.f32 %v69, %v68
    %v71 = vmul.f32 %v70, %v69
    %v72 = vmul.f32 0.5, %v71
    %v73 = vsub.f32 1.5, %v72
    %v74 = vmul.f32 %v69, %v73
    %v75 = vmul.f32 %v68, %v74
    %vm76 = vcmp.eq.f32.partialorder %v68, inf
    %v77 = vsel %vm76, %v68, %v75
    %vm78 = vcmp.eq.f32.partialorder %v68, 0.0
    %v79 = vand.u32 %v68, 2147483648
    %v80 = vsel %vm78, %v79, %v77
    %s81 = vtos %v80
    %v82 = vld [vmem:[%s1] sm:$0xff]
    %v83 = vld [vmem:[%s1 + $0x8] sm:$0xff]
    %v84 = vld [vmem:[#allocation6] sm:$0xff]
    %v85 = vld [vmem:[#allocation6 + $0x8] sm:$0xff]
    %v86 = vld [vmem:[#allocation6 + $0x10] sm:$0xff]
    %v87 = vld [vmem:[#allocation6 + $0x18] sm:$0xff]
    %v88 = vld [vmem:[#allocation6 + $0x20] sm:$0xff]
    %v89 = vld [vmem:[#allocation6 + $0x28] sm:$0xff]
    %v90 = vld [vmem:[#allocation6 + $0x30] sm:$0xff]
    %v91 = vld [vmem:[#allocation6 + $0x38] sm:$0xff]
    %v92 = vld [vmem:[#allocation6 + $0x40] sm:$0xff]
    %v93 = vld [vmem:[#allocation6 + $0x48] sm:$0xff]
    %v94 = vld [vmem:[#allocation6 + $0x50] sm:$0xff]
    %v95 = vld [vmem:[#allocation6 + $0x58] sm:$0xff]
    %v96 = vld [vmem:[#allocation6 + $0x60] sm:$0xff]
    %v97 = vld [vmem:[#allocation6 + $0x68] sm:$0xff]
    %v98 = vld [vmem:[#allocation6 + $0x70] sm:$0xff]
    %v99 = vld [vmem:[#allocation6 + $0x78] sm:$0xff]
    %v100 = vld [vmem:[%s3] sm:$0x1]
    %v101 = vmul.f32 %v82, %v82
    %v102 = vmul.f32 %v83, %v83
    %103 = vadd.xlane.f32.xlu0 %v101
    %v104 = vpop.xlane.xlu0 %103
    %105 = vadd.xlane.f32.xlu0 %v102
    %v106 = vpop.xlane.xlu0 %105
    %v107 = vrsqrt.pop %v104
    %v108 = vmul.f32 %v107, %v104
    %v109 = vmul.f32 %v108, %v107
    %v110 = vmul.f32 0.5, %v109
    %v111 = vsub.f32 1.5, %v110
    %v112 = vmul.f32 %v107, %v111
    %v113 = vmul.f32 %v104, %v112
    %vm114 = vcmp.eq.f32.partialorder %v104, inf
    %v115 = vsel %vm114, %v104, %v113
    %vm116 = vcmp.eq.f32.partialorder %v104, 0.0
    %v117 = vand.u32 %v104, 2147483648
    %v118 = vsel %vm116, %v117, %v115
    %v119 = vrsqrt.pop %v106
    %v120 = vmul.f32 %v119, %v106
    %v121 = vmul.f32 %v120, %v119
    %v122 = vmul.f32 0.5, %v121
    %v123 = vsub.f32 1.5, %v122
    %v124 = vmul.f32 %v119, %v123
    %v125 = vmul.f32 %v106, %v124
    %vm126 = vcmp.eq.f32.partialorder %v106, inf
    %v127 = vsel %vm126, %v106, %v125
    %vm128 = vcmp.eq.f32.partialorder %v106, 0.0
    %v129 = vand.u32 %v106, 2147483648
    %v130 = vsel %vm128, %v129, %v127
    %v131 = vmax.f32 %v118, 1e-15
    %v132 = vmax.f32 %v130, 1e-15
    %133 = vmatpush.msra.mxu0 %v99
    %134 = vmatpush.msra.mxu0 %v98
    %135 = vmatpush.msra.mxu0 %v97
    %136 = vmatpush.msra.mxu0 %v96
    %137 = vmatpush.msra.mxu0 %v95
    %138 = vmatpush.msra.mxu0 %v94
    %139 = vmatpush.msra.mxu0 %v93
    %140 = vmatpush.msra.mxu0 %v92
    %141 = vmatpush.msra.mxu0 %v91
    %142 = vmatpush.msra.mxu0 %v90
    %143 = vmatpush.msra.mxu0 %v89
    %144 = vmatpush.msra.mxu0 %v88
    %145 = vmatpush.msra.mxu0 %v87
    %146 = vmatpush.msra.mxu0 %v86
    %147 = vmatpush.msra.mxu0 %v85
    %148 = vmatpush.msra.mxu0 %v84
    %149 = vmatmul.f32.gmra.mxu0 %v82
    %v150 = vpop.f32.mrf.mxu0
    %v151 = vadd.f32 0.0, %v150
    %152 = vmatmul.f32.gmra.mxu0 %v83
    %v153 = vpop.f32.mrf.mxu0
    %v154 = vadd.f32 0.0, %v153
    %155 = vdwg.mxu0
    %v156 = vmul.f32 %v151, %v151
    %v157 = vmul.f32 %v154, %v154
    %158 = vadd.xlane.f32.xlu0 %v156
    %v159 = vpop.xlane.xlu0 %158
    %160 = vadd.xlane.f32.xlu0 %v157
    %v161 = vpop.xlane.xlu0 %160
    %v162 = vrsqrt.pop %v159
    %v163 = vmul.f32 %v162, %v159
    %v164 = vmul.f32 %v163, %v162
    %v165 = vmul.f32 0.5, %v164
    %v166 = vsub.f32 1.5, %v165
    %v167 = vmul.f32 %v162, %v166
    %v168 = vmul.f32 %v159, %v167
    %vm169 = vcmp.eq.f32.partialorder %v159, inf
    %v170 = vsel %vm169, %v159, %v168
    %vm171 = vcmp.eq.f32.partialorder %v159, 0.0
    %v172 = vand.u32 %v159, 2147483648
    %v173 = vsel %vm171, %v172, %v170
    %v174 = vrsqrt.pop %v161
    %v175 = vmul.f32 %v174, %v161
    %v176 = vmul.f32 %v175, %v174
    %v177 = vmul.f32 0.5, %v176
    %v178 = vsub.f32 1.5, %v177
    %v179 = vmul.f32 %v174, %v178
    %v180 = vmul.f32 %v161, %v179
    %vm181 = vcmp.eq.f32.partialorder %v161, inf
    %v182 = vsel %vm181, %v161, %v180
    %vm183 = vcmp.eq.f32.partialorder %v161, 0.0
    %v184 = vand.u32 %v161, 2147483648
    %v185 = vsel %vm183, %v184, %v182
    %v186 = vmax.f32 %v173, 1e-15
    %v187 = vmax.f32 %v185, 1e-15
    %v188 = vrcp.pop %v131
    %v189 = vmul.f32 %v131, %v188
    %v190 = vsub.f32 1.0, %v189
    %v191 = vmul.f32 %v188, %v190
    %v192 = vadd.f32 %v188, %v191
    %vm193 = vweird.f32 %v131
    %vm194 = vweird.f32 %v188
    %vm195 = vmor %vm193, %vm194
    %v196 = vsel %vm195, %v188, %v192
    %v197 = vand.u32 2147483647, %v131
    %vm198 = vcmp.eq.f32.partialorder %v197, 8.507059e+37
    %v199 = vand.u32 %v131, 2147483648
    %v200 = vor.u32 1.1754944e-38, %v199
    %v201 = vsel %vm198, %v200, %v196
    %v202 = vmul.f32 %v186, %v201
    %v203 = vrcp.pop %v132
    %v204 = vmul.f32 %v132, %v203
    %v205 = vsub.f32 1.0, %v204
    %v206 = vmul.f32 %v203, %v205
    %v207 = vadd.f32 %v203, %v206
    %vm208 = vweird.f32 %v132
    %vm209 = vweird.f32 %v203
    %vm210 = vmor %vm208, %vm209
    %v211 = vsel %vm210, %v203, %v207
    %v212 = vand.u32 2147483647, %v132
    %vm213 = vcmp.eq.f32.partialorder %v212, 8.507059e+37
    %v214 = vand.u32 %v132, 2147483648
    %v215 = vor.u32 1.1754944e-38, %v214
    %v216 = vsel %vm213, %v215, %v211
    %v217 = vmul.f32 %v187, %v216
    %v218 = vstv %s67
    %v219 = vmul.f32 %v218, %v131
    %v220 = vmul.f32 %v218, %v132
    %v221 = vmax.f32 %v219, -0.9999999
    %v222 = vmax.f32 %v220, -0.9999999
    %v223 = vmin.f32 %v221, 0.9999999
    %v224 = vmin.f32 %v222, 0.9999999
    %v225 = vadd.f32 %v223, 1.0
    %v226 = vadd.f32 %v224, 1.0
    %v227 = vsub.f32 1.0, %v223
    %v228 = vsub.f32 1.0, %v224
    %v229 = vrcp.pop %v227
    %v230 = vmul.f32 %v227, %v229
    %v231 = vsub.f32 1.0, %v230
    %v232 = vmul.f32 %v229, %v231
    %v233 = vadd.f32 %v229, %v232
    %vm234 = vweird.f32 %v227
    %vm235 = vweird.f32 %v229
    %vm236 = vmor %vm234, %vm235
    %v237 = vsel %vm236, %v229, %v233
    %v238 = vand.u32 2147483647, %v227
    %vm239 = vcmp.eq.f32.partialorder %v238, 8.507059e+37
    %v240 = vand.u32 %v227, 2147483648
    %v241 = vor.u32 1.1754944e-38, %v240
    %v242 = vsel %vm239, %v241, %v237
    %v243 = vmul.f32 %v225, %v242
    %v244 = vrcp.pop %v228
    %v245 = vmul.f32 %v228, %v244
    %v246 = vsub.f32 1.0, %v245
    %v247 = vmul.f32 %v244, %v246
    %v248 = vadd.f32 %v244, %v247
    %vm249 = vweird.f32 %v228
    %vm250 = vweird.f32 %v244
    %vm251 = vmor %vm249, %vm250
    %v252 = vsel %vm251, %v244, %v248
    %v253 = vand.u32 2147483647, %v228
    %vm254 = vcmp.eq.f32.partialorder %v253, 8.507059e+37
    %v255 = vand.u32 %v228, 2147483648
    %v256 = vor.u32 1.1754944e-38, %v255
    %v257 = vsel %vm254, %v256, %v252
    %v258 = vmul.f32 %v226, %v257
    %v259 = vlog2.pop %v243
    %v260 = vmul.f32 %v259, 0.6931472
    %v261 = vlog2.pop %v258
    %v262 = vmul.f32 %v261, 0.6931472
    %v263 = vmul.f32 %v260, 0.5
    %v264 = vmul.f32 %v262, 0.5
    %v265 = vmul.f32 %v202, %v263
    %v266 = vmul.f32 %v217, %v264
    %v267 = vtanh.pop %v265
    %v268 = vtanh.pop %v266
    %v269 = vmin.f32 %v267, 0.996
    %v270 = vmin.f32 %v268, 0.996
    %v271 = vmul.f32 %v186, %v218
    %v272 = vmul.f32 %v187, %v218
    %v273 = vrcp.pop %v271
    %v274 = vmul.f32 %v271, %v273
    %v275 = vsub.f32 1.0, %v274
    %v276 = vmul.f32 %v273, %v275
    %v277 = vadd.f32 %v273, %v276
    %vm278 = vweird.f32 %v271
    %vm279 = vweird.f32 %v273
    %vm280 = vmor %vm278, %vm279
    %v281 = vsel %vm280, %v273, %v277
    %v282 = vand.u32 2147483647, %v271
    %vm283 = vcmp.eq.f32.partialorder %v282, 8.507059e+37
    %v284 = vand.u32 %v271, 2147483648
    %v285 = vor.u32 1.1754944e-38, %v284
    %v286 = vsel %vm283, %v285, %v281
    %v287 = vmul.f32 %v269, %v286
    %v288 = vrcp.pop %v272
    %v289 = vmul.f32 %v272, %v288
    %v290 = vsub.f32 1.0, %v289
    %v291 = vmul.f32 %v288, %v290
    %v292 = vadd.f32 %v288, %v291
    %vm293 = vweird.f32 %v272
    %vm294 = vweird.f32 %v288
    %vm295 = vmor %vm293, %vm294
    %v296 = vsel %vm295, %v288, %v292
    %v297 = vand.u32 2147483647, %v272
    %vm298 = vcmp.eq.f32.partialorder %v297, 8.507059e+37
    %v299 = vand.u32 %v272, 2147483648
    %v300 = vor.u32 1.1754944e-38, %v299
    %v301 = vsel %vm298, %v300, %v296
    %v302 = vmul.f32 %v270, %v301
    %v303 = vmul.f32 %v151, %v287
    %v304 = vmul.f32 %v154, %v302
    %vm305 = vcmp.eq.f32.partialorder %v159, 0.0
    %vm306 = vcmp.eq.f32.partialorder %v161, 0.0
    %v307 = vsel %vm305, 1, 0
    %v308 = vsel %vm306, 1, 0
    %vm309 = vcmp.eq.s32.totalorder %v307, 1
    %vm310 = vcmp.eq.s32.totalorder %v308, 1
    %v311 = vsel %vm309, 0.0, %v303
    %v312 = vsel %vm310, 0.0, %v304
    %v313 = vmul.f32 %v311, %v311
    %v314 = vmul.f32 %v312, %v312
    %315 = vadd.xlane.f32.xlu0 %v313
    %v316 = vpop.xlane.xlu0 %315
    %317 = vadd.xlane.f32.xlu0 %v314
    %v318 = vpop.xlane.xlu0 %317
    %v320 = vperm.slane %v100, 0
    %v322 = vmul.f32 %v311, %v320
    %v323 = vmul.f32 %v312, %v320
    %324 = vadd.xlane.f32.xlu0 %v322
    %v325 = vpop.xlane.xlu0 %324
    %326 = vadd.xlane.f32.xlu0 %v323
    %v327 = vpop.xlane.xlu0 %326
    %s328 = smul.f32 %s51, 2.0
    %v329 = vstv %s328
    %v330 = vmul.f32 %v329, %v325
    %v331 = vmul.f32 %v329, %v327
    %v332 = vadd.f32 %v330, 1.0
    %v333 = vadd.f32 %v331, 1.0
    %s334 = smul.f32 %s51, %s53
    %v335 = vstv %s334
    %v336 = vadd.f32 %v332, %v335
    %v337 = vadd.f32 %v333, %v335
    %v338 = vmul.f32 %v336, %v311
    %v339 = vmul.f32 %v337, %v312
    %v340 = vstv %s51
    %v341 = vmul.f32 %v340, %v316
    %v342 = vmul.f32 %v340, %v318
    %v343 = vsub.f32 1.0, %v341
    %v344 = vsub.f32 1.0, %v342
    %v345 = vmul.f32 %v343, %v320
    %v346 = vmul.f32 %v344, %v320
    %v347 = vadd.f32 %v338, %v345
    %v348 = vadd.f32 %v339, %v346
    %s349 = smul.f32 %s51, %s51
    %v350 = vstv %s349
    %v351 = vmul.f32 %v350, %v316
    %v352 = vmul.f32 %v350, %v318
    %v353 = vstv %s53
    %v354 = vmul.f32 %v351, %v353
    %v355 = vmul.f32 %v352, %v353
    %v356 = vadd.f32 %v332, %v354
    %v357 = vadd.f32 %v333, %v355
    %v358 = vmax.f32 %v356, 1e-15
    %v359 = vmax.f32 %v357, 1e-15
    %v360 = vrcp.pop %v358
    %v361 = vmul.f32 %v358, %v360
    %v362 = vsub.f32 1.0, %v361
    %v363 = vmul.f32 %v360, %v362
    %v364 = vadd.f32 %v360, %v363
    %vm365 = vweird.f32 %v358
    %vm366 = vweird.f32 %v360
    %vm367 = vmor %vm365, %vm366
    %v368 = vsel %vm367, %v360, %v364
    %v369 = vand.u32 2147483647, %v358
    %vm370 = vcmp.eq.f32.partialorder %v369, 8.507059e+37
    %v371 = vand.u32 %v358, 2147483648
    %v372 = vor.u32 1.1754944e-38, %v371
    %v373 = vsel %vm370, %v372, %v368
    %v374 = vmul.f32 %v347, %v373
    %v375 = vrcp.pop %v359
    %v376 = vmul.f32 %v359, %v375
    %v377 = vsub.f32 1.0, %v376
    %v378 = vmul.f32 %v375, %v377
    %v379 = vadd.f32 %v375, %v378
    %vm380 = vweird.f32 %v359
    %vm381 = vweird.f32 %v375
    %vm382 = vmor %vm380, %vm381
    %v383 = vsel %vm382, %v375, %v379
    %v384 = vand.u32 2147483647, %v359
    %vm385 = vcmp.eq.f32.partialorder %v384, 8.507059e+37
    %v386 = vand.u32 %v359, 2147483648
    %v387 = vor.u32 1.1754944e-38, %v386
    %v388 = vsel %vm385, %v387, %v383
    %v389 = vmul.f32 %v348, %v388
    %v390 = vmul.f32 %v374, %v374
    %v391 = vmul.f32 %v389, %v389
    %392 = vadd.xlane.f32.xlu0 %v390
    %v393 = vpop.xlane.xlu0 %392
    %394 = vadd.xlane.f32.xlu0 %v391
    %v395 = vpop.xlane.xlu0 %394
    %v396 = vmax.f32 %v393, 0.0
    %v397 = vmax.f32 %v395, 0.0
    %v398 = vrsqrt.pop %v396
    %v399 = vmul.f32 %v398, %v396
    %v400 = vmul.f32 %v399, %v398
    %v401 = vmul.f32 0.5, %v400
    %v402 = vsub.f32 1.5, %v401
    %v403 = vmul.f32 %v398, %v402
    %v404 = vmul.f32 %v396, %v403
    %vm405 = vcmp.eq.f32.partialorder %v396, inf
    %v406 = vsel %vm405, %v396, %v404
    %vm407 = vcmp.eq.f32.partialorder %v396, 0.0
    %v408 = vand.u32 %v396, 2147483648
    %v409 = vsel %vm407, %v408, %v406
    %v410 = vrsqrt.pop %v397
    %v411 = vmul.f32 %v410, %v397
    %v412 = vmul.f32 %v411, %v410
    %v413 = vmul.f32 0.5, %v412
    %v414 = vsub.f32 1.5, %v413
    %v415 = vmul.f32 %v410, %v414
    %v416 = vmul.f32 %v397, %v415
    %vm417 = vcmp.eq.f32.partialorder %v397, inf
    %v418 = vsel %vm417, %v397, %v416
    %vm419 = vcmp.eq.f32.partialorder %v397, 0.0
    %v420 = vand.u32 %v397, 2147483648
    %v421 = vsel %vm419, %v420, %v418
    %v422 = vmax.f32 %v409, 1e-15
    %v423 = vmax.f32 %v421, 1e-15
    %v424 = vstv %s67
    %v425 = vrcp.pop %v424
    %v426 = vmul.f32 %v424, %v425
    %v427 = vsub.f32 1.0, %v426
    %v428 = vmul.f32 %v425, %v427
    %v429 = vadd.f32 %v425, %v428
    %vm430 = vweird.f32 %v424
    %vm431 = vweird.f32 %v425
    %vm432 = vmor %vm430, %vm431
    %v433 = vsel %vm432, %v425, %v429
    %v434 = vand.u32 2147483647, %v424
    %vm435 = vcmp.eq.f32.partialorder %v434, 8.507059e+37
    %v436 = vand.u32 %v424, 2147483648
    %v437 = vor.u32 1.1754944e-38, %v436
    %v438 = vsel %vm435, %v437, %v433
    %s439 = vtos %v438
    %s440 = smul.f32 0.996, %s439
    %v441 = vstv %s440
    %v442 = vmin.f32 %v422, %v441
    %v443 = vmin.f32 %v423, %v441
    %v444 = vmul.f32 %v218, %v442
    %v445 = vmul.f32 %v218, %v443
    %v446 = vmax.f32 %v444, -0.9999999
    %v447 = vmax.f32 %v445, -0.9999999
    %v448 = vmin.f32 %v446, 0.9999999
    %v449 = vmin.f32 %v447, 0.9999999
    %v450 = vadd.f32 %v448, 1.0
    %v451 = vadd.f32 %v449, 1.0
    %v452 = vsub.f32 1.0, %v448
    %v453 = vsub.f32 1.0, %v449
    %v454 = vrcp.pop %v452
    %v455 = vmul.f32 %v452, %v454
    %v456 = vsub.f32 1.0, %v455
    %v457 = vmul.f32 %v454, %v456
    %v458 = vadd.f32 %v454, %v457
    %vm459 = vweird.f32 %v452
    %vm460 = vweird.f32 %v454
    %vm461 = vmor %vm459, %vm460
    %v462 = vsel %vm461, %v454, %v458
    %v463 = vand.u32 2147483647, %v452
    %vm464 = vcmp.eq.f32.partialorder %v463, 8.507059e+37
    %v465 = vand.u32 %v452, 2147483648
    %v466 = vor.u32 1.1754944e-38, %v465
    %v467 = vsel %vm464, %v466, %v462
    %v468 = vmul.f32 %v450, %v467
    %v469 = vrcp.pop %v453
    %v470 = vmul.f32 %v453, %v469
    %v471 = vsub.f32 1.0, %v470
    %v472 = vmul.f32 %v469, %v471
    %v473 = vadd.f32 %v469, %v472
    %vm474 = vweird.f32 %v453
    %vm475 = vweird.f32 %v469
    %vm476 = vmor %vm474, %vm475
    %v477 = vsel %vm476, %v469, %v473
    %v478 = vand.u32 2147483647, %v453
    %vm479 = vcmp.eq.f32.partialorder %v478, 8.507059e+37
    %v480 = vand.u32 %v453, 2147483648
    %v481 = vor.u32 1.1754944e-38, %v480
    %v482 = vsel %vm479, %v481, %v477
    %v483 = vmul.f32 %v451, %v482
    %v484 = vlog2.pop %v468
    %v485 = vmul.f32 %v484, 0.6931472
    %v486 = vlog2.pop %v483
    %v487 = vmul.f32 %v486, 0.6931472
    %v488 = vmul.f32 %v485, 0.5
    %v489 = vmul.f32 %v487, 0.5
    %v490 = vmul.f32 %v218, %v422
    %v491 = vmul.f32 %v218, %v423
    %v492 = vrcp.pop %v490
    %v493 = vmul.f32 %v490, %v492
    %v494 = vsub.f32 1.0, %v493
    %v495 = vmul.f32 %v492, %v494
    %v496 = vadd.f32 %v492, %v495
    %vm497 = vweird.f32 %v490
    %vm498 = vweird.f32 %v492
    %vm499 = vmor %vm497, %vm498
    %v500 = vsel %vm499, %v492, %v496
    %v501 = vand.u32 2147483647, %v490
    %vm502 = vcmp.eq.f32.partialorder %v501, 8.507059e+37
    %v503 = vand.u32 %v490, 2147483648
    %v504 = vor.u32 1.1754944e-38, %v503
    %v505 = vsel %vm502, %v504, %v500
    %v506 = vmul.f32 %v488, %v505
    %v507 = vrcp.pop %v491
    %v508 = vmul.f32 %v491, %v507
    %v509 = vsub.f32 1.0, %v508
    %v510 = vmul.f32 %v507, %v509
    %v511 = vadd.f32 %v507, %v510
    %vm512 = vweird.f32 %v491
    %vm513 = vweird.f32 %v507
    %vm514 = vmor %vm512, %vm513
    %v515 = vsel %vm514, %v507, %v511
    %v516 = vand.u32 2147483647, %v491
    %vm517 = vcmp.eq.f32.partialorder %v516, 8.507059e+37
    %v518 = vand.u32 %v491, 2147483648
    %v519 = vor.u32 1.1754944e-38, %v518
    %v520 = vsel %vm517, %v519, %v515
    %v521 = vmul.f32 %v489, %v520
    %v522 = vmul.f32 %v374, %v506
    %v523 = vmul.f32 %v389, %v521
    %v524 = vld [vmem:[%s4] sm:$0xf]
    %v525 = vld [vmem:[%s4 + $0x4] sm:$0xf]
    %v526 = vpack.c.bf16 %v523, %v522
    %v529 = vunpack.c.l.b16 %v524
    %v530 = vunpack.c.l.b16 %v525
    %v531 = vpack.c.b16 %v530, %v529
    %vm532 = vcmask 130048
    %v534 = vsel %vm532, %v531, 0
    %536 = vmatpush.bf16.msra.mxu0 0
    %537 = vmatpush.bf16.msra.mxu0 0
    %538 = vmatpush.bf16.msra.mxu0 0
    %539 = vmatpush.bf16.msra.mxu0 0
    %540 = vmatpush.bf16.msra.mxu0 0
    %541 = vmatpush.bf16.msra.mxu0 0
    %542 = vmatpush.bf16.msra.mxu0 0
    %543 = vmatpush.bf16.msra.mxu0 %v526
    %544 = vmatmul.bf16.gmra.mxu0 %v534
    %v545 = vpop.f32.mrf.mxu0
    %v546 = vadd.f32 0.0, %v545
    %v547 = vpop.f32.mrf.mxu0
    %v548 = vadd.f32 0.0, %v547
    %549 = vdwg.mxu0
    %v550 = vmul.f32 %v546, %v546
    %v551 = vmul.f32 %v548, %v548
    %552 = vadd.xlane.f32.xlu0 %v550
    %v553 = vpop.xlane.xlu0 %552
    %554 = vadd.xlane.f32.xlu0 %v551
    %v555 = vpop.xlane.xlu0 %554
    %v556 = vmax.f32 %v553, 0.0
    %v557 = vmax.f32 %v555, 0.0
    %v558 = vrsqrt.pop %v556
    %v559 = vmul.f32 %v558, %v556
    %v560 = vmul.f32 %v559, %v558
    %v561 = vmul.f32 0.5, %v560
    %v562 = vsub.f32 1.5, %v561
    %v563 = vmul.f32 %v558, %v562
    %v564 = vmul.f32 %v556, %v563
    %vm565 = vcmp.eq.f32.partialorder %v556, inf
    %v566 = vsel %vm565, %v556, %v564
    %vm567 = vcmp.eq.f32.partialorder %v556, 0.0
    %v568 = vand.u32 %v556, 2147483648
    %v569 = vsel %vm567, %v568, %v566
    %v570 = vrsqrt.pop %v557
    %v571 = vmul.f32 %v570, %v557
    %v572 = vmul.f32 %v571, %v570
    %v573 = vmul.f32 0.5, %v572
    %v574 = vsub.f32 1.5, %v573
    %v575 = vmul.f32 %v570, %v574
    %v576 = vmul.f32 %v557, %v575
    %vm577 = vcmp.eq.f32.partialorder %v557, inf
    %v578 = vsel %vm577, %v557, %v576
    %vm579 = vcmp.eq.f32.partialorder %v557, 0.0
    %v580 = vand.u32 %v557, 2147483648
    %v581 = vsel %vm579, %v580, %v578
    %v582 = vmax.f32 %v569, 1e-15
    %v583 = vmax.f32 %v581, 1e-15
    %v584 = vstv %s67
    %v585 = vrcp.pop %v584
    %v586 = vmul.f32 %v584, %v585
    %v587 = vsub.f32 1.0, %v586
    %v588 = vmul.f32 %v585, %v587
    %v589 = vadd.f32 %v585, %v588
    %vm590 = vweird.f32 %v584
    %vm591 = vweird.f32 %v585
    %vm592 = vmor %vm590, %vm591
    %v593 = vsel %vm592, %v585, %v589
    %v594 = vand.u32 2147483647, %v584
    %vm595 = vcmp.eq.f32.partialorder %v594, 8.507059e+37
    %v596 = vand.u32 %v584, 2147483648
    %v597 = vor.u32 1.1754944e-38, %v596
    %v598 = vsel %vm595, %v597, %v593
    %s599 = vtos %v598
    %s600 = smul.f32 3.106303, %s599
    %v601 = vstv %s600
    %vm602 = vcmp.gt.f32.partialorder %v582, %v601
    %vm603 = vcmp.gt.f32.partialorder %v583, %v601
    %v604 = vrcp.pop %v582
    %v605 = vmul.f32 %v582, %v604
    %v606 = vsub.f32 1.0, %v605
    %v607 = vmul.f32 %v604, %v606
    %v608 = vadd.f32 %v604, %v607
    %vm609 = vweird.f32 %v582
    %vm610 = vweird.f32 %v604
    %vm611 = vmor %vm609, %vm610
    %v612 = vsel %vm611, %v604, %v608
    %v613 = vand.u32 2147483647, %v582
    %vm614 = vcmp.eq.f32.partialorder %v613, 8.507059e+37
    %v615 = vand.u32 %v582, 2147483648
    %v616 = vor.u32 1.1754944e-38, %v615
    %v617 = vsel %vm614, %v616, %v612
    %v618 = vmul.f32 %v601, %v617
    %v619 = vrcp.pop %v583
    %v620 = vmul.f32 %v583, %v619
    %v621 = vsub.f32 1.0, %v620
    %v622 = vmul.f32 %v619, %v621
    %v623 = vadd.f32 %v619, %v622
    %vm624 = vweird.f32 %v583
    %vm625 = vweird.f32 %v619
    %vm626 = vmor %vm624, %vm625
    %v627 = vsel %vm626, %v619, %v623
    %v628 = vand.u32 2147483647, %v583
    %vm629 = vcmp.eq.f32.partialorder %v628, 8.507059e+37
    %v630 = vand.u32 %v583, 2147483648
    %v631 = vor.u32 1.1754944e-38, %v630
    %v632 = vsel %vm629, %v631, %v627
    %v633 = vmul.f32 %v601, %v632
    %v634 = vmul.f32 %v546, %v618
    %v635 = vmul.f32 %v548, %v633
    %v636 = vsel %vm602, 1, 0
    %v637 = vsel %vm603, 1, 0
    %vm638 = vcmp.eq.s32.totalorder %v636, 1
    %vm639 = vcmp.eq.s32.totalorder %v637, 1
    %v640 = vsel %vm638, %v634, %v546
    %v641 = vsel %vm639, %v635, %v548
    %v642 = vtanh.pop %v640
    %v643 = vtanh.pop %v641
    %v644 = vmul.f32 %v642, %v642
    %v645 = vmul.f32 %v643, %v643
    %646 = vadd.xlane.f32.xlu0 %v644
    %v647 = vpop.xlane.xlu0 %646
    %648 = vadd.xlane.f32.xlu0 %v645
    %v649 = vpop.xlane.xlu0 %648
    %v650 = vmax.f32 %v647, 0.0
    %v651 = vmax.f32 %v649, 0.0
    %v652 = vrsqrt.pop %v650
    %v653 = vmul.f32 %v652, %v650
    %v654 = vmul.f32 %v653, %v652
    %v655 = vmul.f32 0.5, %v654
    %v656 = vsub.f32 1.5, %v655
    %v657 = vmul.f32 %v652, %v656
    %v658 = vmul.f32 %v650, %v657
    %vm659 = vcmp.eq.f32.partialorder %v650, inf
    %v660 = vsel %vm659, %v650, %v658
    %vm661 = vcmp.eq.f32.partialorder %v650, 0.0
    %v662 = vand.u32 %v650, 2147483648
    %v663 = vsel %vm661, %v662, %v660
    %v664 = vrsqrt.pop %v651
    %v665 = vmul.f32 %v664, %v651
    %v666 = vmul.f32 %v665, %v664
    %v667 = vmul.f32 0.5, %v666
    %v668 = vsub.f32 1.5, %v667
    %v669 = vmul.f32 %v664, %v668
    %v670 = vmul.f32 %v651, %v669
    %vm671 = vcmp.eq.f32.partialorder %v651, inf
    %v672 = vsel %vm671, %v651, %v670
    %vm673 = vcmp.eq.f32.partialorder %v651, 0.0
    %v674 = vand.u32 %v651, 2147483648
    %v675 = vsel %vm673, %v674, %v672
    %v676 = vmax.f32 %v663, 1e-15
    %v677 = vmax.f32 %v675, 1e-15
    %v678 = vstv %s81
    %v679 = vmul.f32 %v678, %v676
    %v680 = vmul.f32 %v678, %v677
    %v681 = vtanh.pop %v679
    %v682 = vtanh.pop %v680
    %v683 = vmin.f32 %v681, 0.996
    %v684 = vmin.f32 %v682, 0.996
    %v685 = vrcp.pop %v679
    %v686 = vmul.f32 %v679, %v685
    %v687 = vsub.f32 1.0, %v686
    %v688 = vmul.f32 %v685, %v687
    %v689 = vadd.f32 %v685, %v688
    %vm690 = vweird.f32 %v679
    %vm691 = vweird.f32 %v685
    %vm692 = vmor %vm690, %vm691
    %v693 = vsel %vm692, %v685, %v689
    %v694 = vand.u32 2147483647, %v679
    %vm695 = vcmp.eq.f32.partialorder %v694, 8.507059e+37
    %v696 = vand.u32 %v679, 2147483648
    %v697 = vor.u32 1.1754944e-38, %v696
    %v698 = vsel %vm695, %v697, %v693
    %v699 = vmul.f32 %v683, %v698
    %v700 = vrcp.pop %v680
    %v701 = vmul.f32 %v680, %v700
    %v702 = vsub.f32 1.0, %v701
    %v703 = vmul.f32 %v700, %v702
    %v704 = vadd.f32 %v700, %v703
    %vm705 = vweird.f32 %v680
    %vm706 = vweird.f32 %v700
    %vm707 = vmor %vm705, %vm706
    %v708 = vsel %vm707, %v700, %v704
    %v709 = vand.u32 2147483647, %v680
    %vm710 = vcmp.eq.f32.partialorder %v709, 8.507059e+37
    %v711 = vand.u32 %v680, 2147483648
    %v712 = vor.u32 1.1754944e-38, %v711
    %v713 = vsel %vm710, %v712, %v708
    %v714 = vmul.f32 %v684, %v713
    %v715 = vmul.f32 %v642, %v699
    %v716 = vmul.f32 %v643, %v714
    %v717 = vmax.f32 %v104, 0.0
    %v718 = vmax.f32 %v106, 0.0
    %v719 = vrsqrt.pop %v717
    %v720 = vmul.f32 %v719, %v717
    %v721 = vmul.f32 %v720, %v719
    %v722 = vmul.f32 0.5, %v721
    %v723 = vsub.f32 1.5, %v722
    %v724 = vmul.f32 %v719, %v723
    %v725 = vmul.f32 %v717, %v724
    %vm726 = vcmp.eq.f32.partialorder %v717, inf
    %v727 = vsel %vm726, %v717, %v725
    %vm728 = vcmp.eq.f32.partialorder %v717, 0.0
    %v729 = vand.u32 %v717, 2147483648
    %v730 = vsel %vm728, %v729, %v727
    %v731 = vrsqrt.pop %v718
    %v732 = vmul.f32 %v731, %v718
    %v733 = vmul.f32 %v732, %v731
    %v734 = vmul.f32 0.5, %v733
    %v735 = vsub.f32 1.5, %v734
    %v736 = vmul.f32 %v731, %v735
    %v737 = vmul.f32 %v718, %v736
    %vm738 = vcmp.eq.f32.partialorder %v718, inf
    %v739 = vsel %vm738, %v718, %v737
    %vm740 = vcmp.eq.f32.partialorder %v718, 0.0
    %v741 = vand.u32 %v718, 2147483648
    %v742 = vsel %vm740, %v741, %v739
    %v743 = vmax.f32 %v730, 1e-15
    %v744 = vmax.f32 %v742, 1e-15
    %v745 = vstv %s67
    %v746 = vrcp.pop %v745
    %v747 = vmul.f32 %v745, %v746
    %v748 = vsub.f32 1.0, %v747
    %v749 = vmul.f32 %v746, %v748
    %v750 = vadd.f32 %v746, %v749
    %vm751 = vweird.f32 %v745
    %vm752 = vweird.f32 %v746
    %vm753 = vmor %vm751, %vm752
    %v754 = vsel %vm753, %v746, %v750
    %v755 = vand.u32 2147483647, %v745
    %vm756 = vcmp.eq.f32.partialorder %v755, 8.507059e+37
    %v757 = vand.u32 %v745, 2147483648
    %v758 = vor.u32 1.1754944e-38, %v757
    %v759 = vsel %vm756, %v758, %v754
    %s760 = vtos %v759
    %s761 = smul.f32 %s81, %s760
    %v762 = vmul.f32 %v218, %v743
    %v763 = vmul.f32 %v218, %v744
    %v764 = vmax.f32 %v762, -0.9999999
    %v765 = vmax.f32 %v763, -0.9999999
    %v766 = vmin.f32 %v764, 0.9999999
    %v767 = vmin.f32 %v765, 0.9999999
    %v768 = vadd.f32 %v766, 1.0
    %v769 = vadd.f32 %v767, 1.0
    %v770 = vsub.f32 1.0, %v766
    %v771 = vsub.f32 1.0, %v767
    %v772 = vrcp.pop %v770
    %v773 = vmul.f32 %v770, %v772
    %v774 = vsub.f32 1.0, %v773
    %v775 = vmul.f32 %v772, %v774
    %v776 = vadd.f32 %v772, %v775
    %vm777 = vweird.f32 %v770
    %vm778 = vweird.f32 %v772
    %vm779 = vmor %vm777, %vm778
    %v780 = vsel %vm779, %v772, %v776
    %v781 = vand.u32 2147483647, %v770
    %vm782 = vcmp.eq.f32.partialorder %v781, 8.507059e+37
    %v783 = vand.u32 %v770, 2147483648
    %v784 = vor.u32 1.1754944e-38, %v783
    %v785 = vsel %vm782, %v784, %v780
    %v786 = vmul.f32 %v768, %v785
    %v787 = vrcp.pop %v771
    %v788 = vmul.f32 %v771, %v787
    %v789 = vsub.f32 1.0, %v788
    %v790 = vmul.f32 %v787, %v789
    %v791 = vadd.f32 %v787, %v790
    %vm792 = vweird.f32 %v771
    %vm793 = vweird.f32 %v787
    %vm794 = vmor %vm792, %vm793
    %v795 = vsel %vm794, %v787, %v791
    %v796 = vand.u32 2147483647, %v771
    %vm797 = vcmp.eq.f32.partialorder %v796, 8.507059e+37
    %v798 = vand.u32 %v771, 2147483648
    %v799 = vor.u32 1.1754944e-38, %v798
    %v800 = vsel %vm797, %v799, %v795
    %v801 = vmul.f32 %v769, %v800
    %v802 = vlog2.pop %v786
    %v803 = vmul.f32 %v802, 0.6931472
    %v804 = vlog2.pop %v801
    %v805 = vmul.f32 %v804, 0.6931472
    %v806 = vmul.f32 %v803, 0.5
    %v807 = vmul.f32 %v805, 0.5
    %v808 = vstv %s761
    %v809 = vmul.f32 %v808, %v806
    %v810 = vmul.f32 %v808, %v807
    %v811 = vtanh.pop %v809
    %v812 = vtanh.pop %v810
    %v813 = vmin.f32 %v811, 0.996
    %v814 = vmin.f32 %v812, 0.996
    %v815 = vmul.f32 %v678, %v743
    %v816 = vmul.f32 %v678, %v744
    %v817 = vrcp.pop %v815
    %v818 = vmul.f32 %v815, %v817
    %v819 = vsub.f32 1.0, %v818
    %v820 = vmul.f32 %v817, %v819
    %v821 = vadd.f32 %v817, %v820
    %vm822 = vweird.f32 %v815
    %vm823 = vweird.f32 %v817
    %vm824 = vmor %vm822, %vm823
    %v825 = vsel %vm824, %v817, %v821
    %v826 = vand.u32 2147483647, %v815
    %vm827 = vcmp.eq.f32.partialorder %v826, 8.507059e+37
    %v828 = vand.u32 %v815, 2147483648
    %v829 = vor.u32 1.1754944e-38, %v828
    %v830 = vsel %vm827, %v829, %v825
    %v831 = vmul.f32 %v813, %v830
    %v832 = vrcp.pop %v816
    %v833 = vmul.f32 %v816, %v832
    %v834 = vsub.f32 1.0, %v833
    %v835 = vmul.f32 %v832, %v834
    %v836 = vadd.f32 %v832, %v835
    %vm837 = vweird.f32 %v816
    %vm838 = vweird.f32 %v832
    %vm839 = vmor %vm837, %vm838
    %v840 = vsel %vm839, %v832, %v836
    %v841 = vand.u32 2147483647, %v816
    %vm842 = vcmp.eq.f32.partialorder %v841, 8.507059e+37
    %v843 = vand.u32 %v816, 2147483648
    %v844 = vor.u32 1.1754944e-38, %v843
    %v845 = vsel %vm842, %v844, %v840
    %v846 = vmul.f32 %v814, %v845
    %v847 = vmul.f32 %v82, %v831
    %v848 = vmul.f32 %v83, %v846
    %v849 = vsub.f32 0.0, %v847
    %v850 = vsub.f32 0.0, %v848
    %v851 = vmul.f32 %v849, %v849
    %v852 = vmul.f32 %v850, %v850
    %853 = vadd.xlane.f32.xlu0 %v851
    %v854 = vpop.xlane.xlu0 %853
    %855 = vadd.xlane.f32.xlu0 %v852
    %v856 = vpop.xlane.xlu0 %855
    %v857 = vmul.f32 %v715, %v715
    %v858 = vmul.f32 %v716, %v716
    %859 = vadd.xlane.f32.xlu0 %v857
    %v860 = vpop.xlane.xlu0 %859
    %861 = vadd.xlane.f32.xlu0 %v858
    %v862 = vpop.xlane.xlu0 %861
    %v863 = vmul.f32 %v849, %v715
    %v864 = vmul.f32 %v850, %v716
    %865 = vadd.xlane.f32.xlu0 %v863
    %v866 = vpop.xlane.xlu0 %865
    %867 = vadd.xlane.f32.xlu0 %v864
    %v868 = vpop.xlane.xlu0 %867
    %s869 = smul.f32 %s52, 2.0
    %v870 = vstv %s869
    %v871 = vmul.f32 %v870, %v866
    %v872 = vmul.f32 %v870, %v868
    %v873 = vadd.f32 %v871, 1.0
    %v874 = vadd.f32 %v872, 1.0
    %v875 = vstv %s52
    %v876 = vmul.f32 %v875, %v860
    %v877 = vmul.f32 %v875, %v862
    %v878 = vadd.f32 %v873, %v876
    %v879 = vadd.f32 %v874, %v877
    %v880 = vmul.f32 %v878, %v849
    %v881 = vmul.f32 %v879, %v850
    %v882 = vmul.f32 %v875, %v854
    %v883 = vmul.f32 %v875, %v856
    %v884 = vsub.f32 1.0, %v882
    %v885 = vsub.f32 1.0, %v883
    %v886 = vmul.f32 %v884, %v715
    %v887 = vmul.f32 %v885, %v716
    %v888 = vadd.f32 %v880, %v886
    %v889 = vadd.f32 %v881, %v887
    %s890 = smul.f32 %s52, %s52
    %v891 = vstv %s890
    %v892 = vmul.f32 %v891, %v854
    %v893 = vmul.f32 %v891, %v856
    %v894 = vmul.f32 %v892, %v860
    %v895 = vmul.f32 %v893, %v862
    %v896 = vadd.f32 %v873, %v894
    %v897 = vadd.f32 %v874, %v895
    %v898 = vmax.f32 %v896, 1e-15
    %v899 = vmax.f32 %v897, 1e-15
    %v900 = vrcp.pop %v898
    %v901 = vmul.f32 %v898, %v900
    %v902 = vsub.f32 1.0, %v901
    %v903 = vmul.f32 %v900, %v902
    %v904 = vadd.f32 %v900, %v903
    %vm905 = vweird.f32 %v898
    %vm906 = vweird.f32 %v900
    %vm907 = vmor %vm905, %vm906
    %v908 = vsel %vm907, %v900, %v904
    %v909 = vand.u32 2147483647, %v898
    %vm910 = vcmp.eq.f32.partialorder %v909, 8.507059e+37
    %v911 = vand.u32 %v898, 2147483648
    %v912 = vor.u32 1.1754944e-38, %v911
    %v913 = vsel %vm910, %v912, %v908
    %v914 = vmul.f32 %v888, %v913
    %v915 = vrcp.pop %v899
    %v916 = vmul.f32 %v899, %v915
    %v917 = vsub.f32 1.0, %v916
    %v918 = vmul.f32 %v915, %v917
    %v919 = vadd.f32 %v915, %v918
    %vm920 = vweird.f32 %v899
    %vm921 = vweird.f32 %v915
    %vm922 = vmor %vm920, %vm921
    %v923 = vsel %vm922, %v915, %v919
    %v924 = vand.u32 2147483647, %v899
    %vm925 = vcmp.eq.f32.partialorder %v924, 8.507059e+37
    %v926 = vand.u32 %v899, 2147483648
    %v927 = vor.u32 1.1754944e-38, %v926
    %v928 = vsel %vm925, %v927, %v923
    %v929 = vmul.f32 %v889, %v928
    %v930 = vmul.f32 %v914, %v914
    %v931 = vmul.f32 %v929, %v929
    %932 = vadd.xlane.f32.xlu0 %v930
    %v933 = vpop.xlane.xlu0 %932
    %934 = vadd.xlane.f32.xlu0 %v931
    %v935 = vpop.xlane.xlu0 %934
    %v936 = vmax.f32 %v933, 0.0
    %v937 = vmax.f32 %v935, 0.0
    %v938 = vrsqrt.pop %v936
    %v939 = vmul.f32 %v938, %v936
    %v940 = vmul.f32 %v939, %v938
    %v941 = vmul.f32 0.5, %v940
    %v942 = vsub.f32 1.5, %v941
    %v943 = vmul.f32 %v938, %v942
    %v944 = vmul.f32 %v936, %v943
    %vm945 = vcmp.eq.f32.partialorder %v936, inf
    %v946 = vsel %vm945, %v936, %v944
    %vm947 = vcmp.eq.f32.partialorder %v936, 0.0
    %v948 = vand.u32 %v936, 2147483648
    %v949 = vsel %vm947, %v948, %v946
    %v950 = vrsqrt.pop %v937
    %v951 = vmul.f32 %v950, %v937
    %v952 = vmul.f32 %v951, %v950
    %v953 = vmul.f32 0.5, %v952
    %v954 = vsub.f32 1.5, %v953
    %v955 = vmul.f32 %v950, %v954
    %v956 = vmul.f32 %v937, %v955
    %vm957 = vcmp.eq.f32.partialorder %v937, inf
    %v958 = vsel %vm957, %v937, %v956
    %vm959 = vcmp.eq.f32.partialorder %v937, 0.0
    %v960 = vand.u32 %v937, 2147483648
    %v961 = vsel %vm959, %v960, %v958
    %v962 = vmax.f32 %v949, 1e-15
    %v963 = vmax.f32 %v961, 1e-15
    %v964 = vmul.f32 %v678, %v962
    %v965 = vmul.f32 %v678, %v963
    %v966 = vmax.f32 %v964, -0.9999999
    %v967 = vmax.f32 %v965, -0.9999999
    %v968 = vmin.f32 %v966, 0.9999999
    %v969 = vmin.f32 %v967, 0.9999999
    %v970 = vadd.f32 %v968, 1.0
    %v971 = vadd.f32 %v969, 1.0
    %v972 = vsub.f32 1.0, %v968
    %v973 = vsub.f32 1.0, %v969
    %v974 = vrcp.pop %v972
    %v975 = vmul.f32 %v972, %v974
    %v976 = vsub.f32 1.0, %v975
    %v977 = vmul.f32 %v974, %v976
    %v978 = vadd.f32 %v974, %v977
    %vm979 = vweird.f32 %v972
    %vm980 = vweird.f32 %v974
    %vm981 = vmor %vm979, %vm980
    %v982 = vsel %vm981, %v974, %v978
    %v983 = vand.u32 2147483647, %v972
    %vm984 = vcmp.eq.f32.partialorder %v983, 8.507059e+37
    %v985 = vand.u32 %v972, 2147483648
    %v986 = vor.u32 1.1754944e-38, %v985
    %v987 = vsel %vm984, %v986, %v982
    %v988 = vmul.f32 %v970, %v987
    %v989 = vrcp.pop %v973
    %v990 = vmul.f32 %v973, %v989
    %v991 = vsub.f32 1.0, %v990
    %v992 = vmul.f32 %v989, %v991
    %v993 = vadd.f32 %v989, %v992
    %vm994 = vweird.f32 %v973
    %vm995 = vweird.f32 %v989
    %vm996 = vmor %vm994, %vm995
    %v997 = vsel %vm996, %v989, %v993
    %v998 = vand.u32 2147483647, %v973
    %vm999 = vcmp.eq.f32.partialorder %v998, 8.507059e+37
    %v1000 = vand.u32 %v973, 2147483648
    %v1001 = vor.u32 1.1754944e-38, %v1000
    %v1002 = vsel %vm999, %v1001, %v997
    %v1003 = vmul.f32 %v971, %v1002
    %v1004 = vlog2.pop %v988
    %v1005 = vmul.f32 %v1004, 0.6931472
    %v1006 = vlog2.pop %v1003
    %v1007 = vmul.f32 %v1006, 0.6931472
    %v1008 = vmul.f32 %v1005, 0.5
    %v1009 = vmul.f32 %v1007, 0.5
    %v1010 = vmul.f32 %v1008, 0.5
    %v1011 = vmul.f32 %v1009, 0.5
    %v1012 = vtanh.pop %v1010
    %v1013 = vtanh.pop %v1011
    %v1014 = vrcp.pop %v964
    %v1015 = vmul.f32 %v964, %v1014
    %v1016 = vsub.f32 1.0, %v1015
    %v1017 = vmul.f32 %v1014, %v1016
    %v1018 = vadd.f32 %v1014, %v1017
    %vm1019 = vweird.f32 %v964
    %vm1020 = vweird.f32 %v1014
    %vm1021 = vmor %vm1019, %vm1020
    %v1022 = vsel %vm1021, %v1014, %v1018
    %v1023 = vand.u32 2147483647, %v964
    %vm1024 = vcmp.eq.f32.partialorder %v1023, 8.507059e+37
    %v1025 = vand.u32 %v964, 2147483648
    %v1026 = vor.u32 1.1754944e-38, %v1025
    %v1027 = vsel %vm1024, %v1026, %v1022
    %v1028 = vmul.f32 %v1012, %v1027
    %v1029 = vrcp.pop %v965
    %v1030 = vmul.f32 %v965, %v1029
    %v1031 = vsub.f32 1.0, %v1030
    %v1032 = vmul.f32 %v1029, %v1031
    %v1033 = vadd.f32 %v1029, %v1032
    %vm1034 = vweird.f32 %v965
    %vm1035 = vweird.f32 %v1029
    %vm1036 = vmor %vm1034, %vm1035
    %v1037 = vsel %vm1036, %v1029, %v1033
    %v1038 = vand.u32 2147483647, %v965
    %vm1039 = vcmp.eq.f32.partialorder %v1038, 8.507059e+37
    %v1040 = vand.u32 %v965, 2147483648
    %v1041 = vor.u32 1.1754944e-38, %v1040
    %v1042 = vsel %vm1039, %v1041, %v1037
    %v1043 = vmul.f32 %v1013, %v1042
    %v1044 = vmul.f32 %v914, %v1028
    %v1045 = vmul.f32 %v929, %v1043
    %v1046 = vmul.f32 %v847, %v847
    %v1047 = vmul.f32 %v848, %v848
    %1048 = vadd.xlane.f32.xlu0 %v1046
    %v1049 = vpop.xlane.xlu0 %1048
    %1050 = vadd.xlane.f32.xlu0 %v1047
    %v1051 = vpop.xlane.xlu0 %1050
    %v1052 = vmul.f32 %v1044, %v1044
    %v1053 = vmul.f32 %v1045, %v1045
    %1054 = vadd.xlane.f32.xlu0 %v1052
    %v1055 = vpop.xlane.xlu0 %1054
    %1056 = vadd.xlane.f32.xlu0 %v1053
    %v1057 = vpop.xlane.xlu0 %1056
    %v1058 = vmul.f32 %v847, %v1044
    %v1059 = vmul.f32 %v848, %v1045
    %1060 = vadd.xlane.f32.xlu0 %v1058
    %v1061 = vpop.xlane.xlu0 %1060
    %1062 = vadd.xlane.f32.xlu0 %v1059
    %v1063 = vpop.xlane.xlu0 %1062
    %v1064 = vmul.f32 %v870, %v1061
    %v1065 = vmul.f32 %v870, %v1063
    %v1066 = vadd.f32 %v1064, 1.0
    %v1067 = vadd.f32 %v1065, 1.0
    %v1068 = vmul.f32 %v875, %v1055
    %v1069 = vmul.f32 %v875, %v1057
    %v1070 = vadd.f32 %v1066, %v1068
    %v1071 = vadd.f32 %v1067, %v1069
    %v1072 = vmul.f32 %v1070, %v847
    %v1073 = vmul.f32 %v1071, %v848
    %v1074 = vmul.f32 %v875, %v1049
    %v1075 = vmul.f32 %v875, %v1051
    %v1076 = vsub.f32 1.0, %v1074
    %v1077 = vsub.f32 1.0, %v1075
    %v1078 = vmul.f32 %v1076, %v1044
    %v1079 = vmul.f32 %v1077, %v1045
    %v1080 = vadd.f32 %v1072, %v1078
    %v1081 = vadd.f32 %v1073, %v1079
    %v1082 = vmul.f32 %v891, %v1049
    %v1083 = vmul.f32 %v891, %v1051
    %v1084 = vmul.f32 %v1082, %v1055
    %v1085 = vmul.f32 %v1083, %v1057
    %v1086 = vadd.f32 %v1066, %v1084
    %v1087 = vadd.f32 %v1067, %v1085
    %v1088 = vmax.f32 %v1086, 1e-15
    %v1089 = vmax.f32 %v1087, 1e-15
    %v1090 = vrcp.pop %v1088
    %v1091 = vmul.f32 %v1088, %v1090
    %v1092 = vsub.f32 1.0, %v1091
    %v1093 = vmul.f32 %v1090, %v1092
    %v1094 = vadd.f32 %v1090, %v1093
    %vm1095 = vweird.f32 %v1088
    %vm1096 = vweird.f32 %v1090
    %vm1097 = vmor %vm1095, %vm1096
    %v1098 = vsel %vm1097, %v1090, %v1094
    %v1099 = vand.u32 2147483647, %v1088
    %vm1100 = vcmp.eq.f32.partialorder %v1099, 8.507059e+37
    %v1101 = vand.u32 %v1088, 2147483648
    %v1102 = vor.u32 1.1754944e-38, %v1101
    %v1103 = vsel %vm1100, %v1102, %v1098
    %v1104 = vmul.f32 %v1080, %v1103
    %v1105 = vrcp.pop %v1089
    %v1106 = vmul.f32 %v1089, %v1105
    %v1107 = vsub.f32 1.0, %v1106
    %v1108 = vmul.f32 %v1105, %v1107
    %v1109 = vadd.f32 %v1105, %v1108
    %vm1110 = vweird.f32 %v1089
    %vm1111 = vweird.f32 %v1105
    %vm1112 = vmor %vm1110, %vm1111
    %v1113 = vsel %vm1112, %v1105, %v1109
    %v1114 = vand.u32 2147483647, %v1089
    %vm1115 = vcmp.eq.f32.partialorder %v1114, 8.507059e+37
    %v1116 = vand.u32 %v1089, 2147483648
    %v1117 = vor.u32 1.1754944e-38, %v1116
    %v1118 = vsel %vm1115, %v1117, %v1113
    %v1119 = vmul.f32 %v1081, %v1118
    %v1120 = vmul.f32 %v1104, %v1104
    %v1121 = vmul.f32 %v1119, %v1119
    %1122 = vadd.xlane.f32.xlu0 %v1120
    %v1123 = vpop.xlane.xlu0 %1122
    %1124 = vadd.xlane.f32.xlu0 %v1121
    %v1125 = vpop.xlane.xlu0 %1124
    %v1126 = vmax.f32 %v1123, 0.0
    %v1127 = vmax.f32 %v1125, 0.0
    %v1128 = vrsqrt.pop %v1126
    %v1129 = vmul.f32 %v1128, %v1126
    %v1130 = vmul.f32 %v1129, %v1128
    %v1131 = vmul.f32 0.5, %v1130
    %v1132 = vsub.f32 1.5, %v1131
    %v1133 = vmul.f32 %v1128, %v1132
    %v1134 = vmul.f32 %v1126, %v1133
    %vm1135 = vcmp.eq.f32.partialorder %v1126, inf
    %v1136 = vsel %vm1135, %v1126, %v1134
    %vm1137 = vcmp.eq.f32.partialorder %v1126, 0.0
    %v1138 = vand.u32 %v1126, 2147483648
    %v1139 = vsel %vm1137, %v1138, %v1136
    %v1140 = vrsqrt.pop %v1127
    %v1141 = vmul.f32 %v1140, %v1127
    %v1142 = vmul.f32 %v1141, %v1140
    %v1143 = vmul.f32 0.5, %v1142
    %v1144 = vsub.f32 1.5, %v1143
    %v1145 = vmul.f32 %v1140, %v1144
    %v1146 = vmul.f32 %v1127, %v1145
    %vm1147 = vcmp.eq.f32.partialorder %v1127, inf
    %v1148 = vsel %vm1147, %v1127, %v1146
    %vm1149 = vcmp.eq.f32.partialorder %v1127, 0.0
    %v1150 = vand.u32 %v1127, 2147483648
    %v1151 = vsel %vm1149, %v1150, %v1148
    %v1152 = vmax.f32 %v1139, 1e-15
    %v1153 = vmax.f32 %v1151, 1e-15
    %v1154 = vstv %s81
    %v1155 = vrcp.pop %v1154
    %v1156 = vmul.f32 %v1154, %v1155
    %v1157 = vsub.f32 1.0, %v1156
    %v1158 = vmul.f32 %v1155, %v1157
    %v1159 = vadd.f32 %v1155, %v1158
    %vm1160 = vweird.f32 %v1154
    %vm1161 = vweird.f32 %v1155
    %vm1162 = vmor %vm1160, %vm1161
    %v1163 = vsel %vm1162, %v1155, %v1159
    %v1164 = vand.u32 2147483647, %v1154
    %vm1165 = vcmp.eq.f32.partialorder %v1164, 8.507059e+37
    %v1166 = vand.u32 %v1154, 2147483648
    %v1167 = vor.u32 1.1754944e-38, %v1166
    %v1168 = vsel %vm1165, %v1167, %v1163
    %s1169 = vtos %v1168
    %s1170 = smul.f32 0.996, %s1169
    %v1171 = vstv %s1170
    %vm1172 = vcmp.gt.f32.partialorder %v1152, %v1171
    %vm1173 = vcmp.gt.f32.partialorder %v1153, %v1171
    %v1174 = vrcp.pop %v1152
    %v1175 = vmul.f32 %v1152, %v1174
    %v1176 = vsub.f32 1.0, %v1175
    %v1177 = vmul.f32 %v1174, %v1176
    %v1178 = vadd.f32 %v1174, %v1177
    %vm1179 = vweird.f32 %v1152
    %vm1180 = vweird.f32 %v1174
    %vm1181 = vmor %vm1179, %vm1180
    %v1182 = vsel %vm1181, %v1174, %v1178
    %v1183 = vand.u32 2147483647, %v1152
    %vm1184 = vcmp.eq.f32.partialorder %v1183, 8.507059e+37
    %v1185 = vand.u32 %v1152, 2147483648
    %v1186 = vor.u32 1.1754944e-38, %v1185
    %v1187 = vsel %vm1184, %v1186, %v1182
    %v1188 = vmul.f32 %v1171, %v1187
    %v1189 = vrcp.pop %v1153
    %v1190 = vmul.f32 %v1153, %v1189
    %v1191 = vsub.f32 1.0, %v1190
    %v1192 = vmul.f32 %v1189, %v1191
    %v1193 = vadd.f32 %v1189, %v1192
    %vm1194 = vweird.f32 %v1153
    %vm1195 = vweird.f32 %v1189
    %vm1196 = vmor %vm1194, %vm1195
    %v1197 = vsel %vm1196, %v1189, %v1193
    %v1198 = vand.u32 2147483647, %v1153
    %vm1199 = vcmp.eq.f32.partialorder %v1198, 8.507059e+37
    %v1200 = vand.u32 %v1153, 2147483648
    %v1201 = vor.u32 1.1754944e-38, %v1200
    %v1202 = vsel %vm1199, %v1201, %v1197
    %v1203 = vmul.f32 %v1171, %v1202
    %v1204 = vmul.f32 %v1104, %v1188
    %v1205 = vmul.f32 %v1119, %v1203
    %v1206 = vsel %vm1172, 1, 0
    %v1207 = vsel %vm1173, 1, 0
    %vm1208 = vcmp.eq.s32.totalorder %v1206, 1
    %vm1209 = vcmp.eq.s32.totalorder %v1207, 1
    %v1210 = vsel %vm1208, %v1204, %v1104
    %v1211 = vsel %vm1209, %v1205, %v1119
    %1212 = vst [vmem:[#allocation7] sm:$0xff] %v1210
    %1213 = vst [vmem:[#allocation7 + $0x8] sm:$0xff] %v1211
    // Predicated region
    $region30: #{hgcn_residual_forward.3} parent=1 // pred_check
      _
    $region31: #{hgcn_residual_forward.3} parent=1 // pred_check_branch
      %1215 = sbr.rel (0) target = $region33
    $region32: #{hgcn_residual_forward.3} parent=1 // pred_region
      %1217 = vsyncadd [#allocation4], 0
      %s1218 = sshll.u32 [#allocation7], 4
      %s1219 = int_to_ptr.vmem [resolvable:$true] %s1218
      %s1220 = sshll.u32 %s5, 4
      %s1221 = int_to_ptr.hbm [resolvable:$true] %s1220
      %1226 = dma.vmem_to_hbm [thread:$0]  %s1219, 256, %s1221, [#allocation4], 128, 128, 8
    $region33: #{hgcn_residual_forward.3} parent=1 // pred_fallthru
      _
    // Predicated region
    $region34: #{hgcn_residual_forward.3} parent=1 // pred_check
      _
    $region35: #{hgcn_residual_forward.3} parent=1 // pred_check_branch
      %1228 = sbr.rel (0) target = $region37
    $region36: #{hgcn_residual_forward.3} parent=1 // pred_region
      %1230 = dma.done [#allocation4], 256
    $region37: #{hgcn_residual_forward.3} parent=1 // pred_fallthru
      _
    %1231 = vsyncpa [#allocation3], 1
    %1232 = vsyncpa [#allocation4], 1
    %1233 = vsyncpa [#allocation5], 1

// kernel: hgcn_residual_forward.2
$region0: #{hgcn_residual_forward.2}
  #allocation0 [shape = 'u32[]', space=smem, size = 0x4, offset = 0x4, fixed_abs, tag = 'smem constant byte address 0x4 - core index']
  #allocation1 [shape = 'u32[72,128]{1,0:T(1,128)}', space=vmem, size = 0x9000, scoped, tag = 'internal scratch']
  %s0 = inlined_call_operand.vmem [shape: f32[3], index: 0, kind: input, shape index: {}]
  %s1 = inlined_call_operand.vmem [shape: f32[16,128], index: 1, kind: input, shape index: {}]
  %s2 = inlined_call_operand.hbm [shape: f32[128,128], index: 2, kind: input, shape index: {}]
  %s3 = inlined_call_operand.vmem [shape: f32[1,128], index: 3, kind: input, shape index: {}]
  %s4 = inlined_call_operand.vmem [shape: bf16[16,16], index: 4, kind: input, shape index: {}]
  %s5 = inlined_call_operand.vmem [shape: f32[16,128], index: 5, kind: output, shape index: {}]
  %s6 = sld [smem:[#allocation0]]
  $region38: #{hgcn_residual_forward.2} parent=0
    _
  %s8 = ssub.s32 1, %s6
  %s9 = scalar_select 0, %s8, %s6
  $region1: #{hgcn_residual_forward.2} parent=0
    #allocation2 [shape = 'u8[512]{0}', space=smem, size = 0x200, scoped, tag = 'input window, operand 0, single buffered']
    #allocation3 [shape = 's32[1]{0}', space=sflag, size = 0x4, scoped, tag = 'scoped memory for hgcn_residual_forward.2']
    #allocation4 [shape = 's32[1]{0}', space=sflag, size = 0x4, scoped, tag = 'scoped memory for hgcn_residual_forward.2']
    #allocation5 [shape = 'u8[65536]{0}', space=vmem, size = 0x10000, scoped, tag = 'input window, operand 2, single buffered']
    %10 = vsyncpa [#allocation4], 0
    %11 = vsyncpa [#allocation3], 0
    // Predicated region
    $region2: #{hgcn_residual_forward.2} parent=1 // pred_check
      _
    $region3: #{hgcn_residual_forward.2} parent=1 // pred_check_branch
      %13 = sbr.rel (0) target = $region5
    $region4: #{hgcn_residual_forward.2} parent=1 // pred_region
      %15 = vsyncadd [#allocation4], 0
      %s17 = sshll.u32 %s0, 4
      %s18 = int_to_ptr.vmem [resolvable:$true] %s17
      %20 = dma.vmem_to_smem %s18, 16, [#allocation2], [#allocation4]
    $region5: #{hgcn_residual_forward.2} parent=1 // pred_fallthru
      _
    // Predicated region
    $region6: #{hgcn_residual_forward.2} parent=1 // pred_check
      _
    $region7: #{hgcn_residual_forward.2} parent=1 // pred_check_branch
      %22 = sbr.rel (0) target = $region9
    $region8: #{hgcn_residual_forward.2} parent=1 // pred_region
      _
    $region9: #{hgcn_residual_forward.2} parent=1 // pred_fallthru
      _
    // Predicated region
    $region10: #{hgcn_residual_forward.2} parent=1 // pred_check
      _
    $region11: #{hgcn_residual_forward.2} parent=1 // pred_check_branch
      %24 = sbr.rel (0) target = $region13
    $region12: #{hgcn_residual_forward.2} parent=1 // pred_region
      %26 = vsyncadd [#allocation3], 0
      %s27 = sshll.u32 %s2, 4
      %s28 = int_to_ptr.hbm [resolvable:$true] %s27
      %s29 = sshll.u32 [#allocation5], 4
      %s30 = int_to_ptr.vmem [resolvable:$true] %s29
      %35 = dma.hbm_to_vmem [thread:$0]  %s28, 2048, %s30, [#allocation3], 128, 128, 8
    $region13: #{hgcn_residual_forward.2} parent=1 // pred_fallthru
      _
    // Predicated region
    $region14: #{hgcn_residual_forward.2} parent=1 // pred_check
      _
    $region15: #{hgcn_residual_forward.2} parent=1 // pred_check_branch
      %37 = sbr.rel (0) target = $region17
    $region16: #{hgcn_residual_forward.2} parent=1 // pred_region
      _
    $region17: #{hgcn_residual_forward.2} parent=1 // pred_fallthru
      _
    // Predicated region
    $region18: #{hgcn_residual_forward.2} parent=1 // pred_check
      _
    $region19: #{hgcn_residual_forward.2} parent=1 // pred_check_branch
      %39 = sbr.rel (0) target = $region21
    $region20: #{hgcn_residual_forward.2} parent=1 // pred_region
      _
    $region21: #{hgcn_residual_forward.2} parent=1 // pred_fallthru
      _
    // Predicated region
    $region22: #{hgcn_residual_forward.2} parent=1 // pred_check
      _
    $region23: #{hgcn_residual_forward.2} parent=1 // pred_check_branch
      %41 = sbr.rel (0) target = $region25
    $region24: #{hgcn_residual_forward.2} parent=1 // pred_region
      %43 = dma.done [#allocation4], 16
    $region25: #{hgcn_residual_forward.2} parent=1 // pred_fallthru
      _
    // Predicated region
    $region26: #{hgcn_residual_forward.2} parent=1 // pred_check
      _
    $region27: #{hgcn_residual_forward.2} parent=1 // pred_check_branch
      %45 = sbr.rel (0) target = $region29
    $region28: #{hgcn_residual_forward.2} parent=1 // pred_region
      %47 = dma.done [#allocation3], 2048
    $region29: #{hgcn_residual_forward.2} parent=1 // pred_fallthru
      _
    %48 = sfence
    %s50 = sld [smem:[#allocation2]]
    %s51 = sld [smem:[#allocation2 + $0x1]]
    %s52 = sld [smem:[#allocation2 + $0x2]]
    %v53 = vstv %s50
    %v54 = vrsqrt.pop %v53
    %v55 = vmul.f32 %v54, %v53
    %v56 = vmul.f32 %v55, %v54
    %v57 = vmul.f32 0.5, %v56
    %v58 = vsub.f32 1.5, %v57
    %v59 = vmul.f32 %v54, %v58
    %v60 = vmul.f32 %v53, %v59
    %vm61 = vcmp.eq.f32.partialorder %v53, inf
    %v62 = vsel %vm61, %v53, %v60
    %vm63 = vcmp.eq.f32.partialorder %v53, 0.0
    %v64 = vand.u32 %v53, 2147483648
    %v65 = vsel %vm63, %v64, %v62
    %s66 = vtos %v65
    %v67 = vld [vmem:[%s1] sm:$0xff]
    %v68 = vld [vmem:[%s1 + $0x8] sm:$0xff]
    %v69 = vld [vmem:[#allocation5] sm:$0xff]
    %v70 = vld [vmem:[#allocation5 + $0x8] sm:$0xff]
    %v71 = vld [vmem:[#allocation5 + $0x10] sm:$0xff]
    %v72 = vld [vmem:[#allocation5 + $0x18] sm:$0xff]
    %v73 = vld [vmem:[#allocation5 + $0x20] sm:$0xff]
    %v74 = vld [vmem:[#allocation5 + $0x28] sm:$0xff]
    %v75 = vld [vmem:[#allocation5 + $0x30] sm:$0xff]
    %v76 = vld [vmem:[#allocation5 + $0x38] sm:$0xff]
    %v77 = vld [vmem:[#allocation5 + $0x40] sm:$0xff]
    %v78 = vld [vmem:[#allocation5 + $0x48] sm:$0xff]
    %v79 = vld [vmem:[#allocation5 + $0x50] sm:$0xff]
    %v80 = vld [vmem:[#allocation5 + $0x58] sm:$0xff]
    %v81 = vld [vmem:[#allocation5 + $0x60] sm:$0xff]
    %v82 = vld [vmem:[#allocation5 + $0x68] sm:$0xff]
    %v83 = vld [vmem:[#allocation5 + $0x70] sm:$0xff]
    %v84 = vld [vmem:[#allocation5 + $0x78] sm:$0xff]
    %v85 = vld [vmem:[%s3] sm:$0x1]
    %v86 = vmul.f32 %v67, %v67
    %v87 = vmul.f32 %v68, %v68
    %88 = vadd.xlane.f32.xlu0 %v86
    %v89 = vpop.xlane.xlu0 %88
    %90 = vadd.xlane.f32.xlu0 %v87
    %v91 = vpop.xlane.xlu0 %90
    %v92 = vmax.f32 %v89, 0.0
    %v93 = vmax.f32 %v91, 0.0
    %v94 = vrsqrt.pop %v92
    %v95 = vmul.f32 %v94, %v92
    %v96 = vmul.f32 %v95, %v94
    %v97 = vmul.f32 0.5, %v96
    %v98 = vsub.f32 1.5, %v97
    %v99 = vmul.f32 %v94, %v98
    %v100 = vmul.f32 %v92, %v99
    %vm101 = vcmp.eq.f32.partialorder %v92, inf
    %v102 = vsel %vm101, %v92, %v100
    %vm103 = vcmp.eq.f32.partialorder %v92, 0.0
    %v104 = vand.u32 %v92, 2147483648
    %v105 = vsel %vm103, %v104, %v102
    %v106 = vrsqrt.pop %v93
    %v107 = vmul.f32 %v106, %v93
    %v108 = vmul.f32 %v107, %v106
    %v109 = vmul.f32 0.5, %v108
    %v110 = vsub.f32 1.5, %v109
    %v111 = vmul.f32 %v106, %v110
    %v112 = vmul.f32 %v93, %v111
    %vm113 = vcmp.eq.f32.partialorder %v93, inf
    %v114 = vsel %vm113, %v93, %v112
    %vm115 = vcmp.eq.f32.partialorder %v93, 0.0
    %v116 = vand.u32 %v93, 2147483648
    %v117 = vsel %vm115, %v116, %v114
    %v118 = vmax.f32 %v105, 1e-15
    %v119 = vmax.f32 %v117, 1e-15
    %v120 = vstv %s66
    %v121 = vmul.f32 %v120, %v118
    %v122 = vmul.f32 %v120, %v119
    %v123 = vtanh.pop %v121
    %v124 = vtanh.pop %v122
    %v125 = vmin.f32 %v123, 0.996
    %v126 = vmin.f32 %v124, 0.996
    %v127 = vrcp.pop %v121
    %v128 = vmul.f32 %v121, %v127
    %v129 = vsub.f32 1.0, %v128
    %v130 = vmul.f32 %v127, %v129
    %v131 = vadd.f32 %v127, %v130
    %vm132 = vweird.f32 %v121
    %vm133 = vweird.f32 %v127
    %vm134 = vmor %vm132, %vm133
    %v135 = vsel %vm134, %v127, %v131
    %v136 = vand.u32 2147483647, %v121
    %vm137 = vcmp.eq.f32.partialorder %v136, 8.507059e+37
    %v138 = vand.u32 %v121, 2147483648
    %v139 = vor.u32 1.1754944e-38, %v138
    %v140 = vsel %vm137, %v139, %v135
    %v141 = vmul.f32 %v125, %v140
    %v142 = vrcp.pop %v122
    %v143 = vmul.f32 %v122, %v142
    %v144 = vsub.f32 1.0, %v143
    %v145 = vmul.f32 %v142, %v144
    %v146 = vadd.f32 %v142, %v145
    %vm147 = vweird.f32 %v122
    %vm148 = vweird.f32 %v142
    %vm149 = vmor %vm147, %vm148
    %v150 = vsel %vm149, %v142, %v146
    %v151 = vand.u32 2147483647, %v122
    %vm152 = vcmp.eq.f32.partialorder %v151, 8.507059e+37
    %v153 = vand.u32 %v122, 2147483648
    %v154 = vor.u32 1.1754944e-38, %v153
    %v155 = vsel %vm152, %v154, %v150
    %v156 = vmul.f32 %v126, %v155
    %v157 = vmul.f32 %v67, %v141
    %v158 = vmul.f32 %v68, %v156
    %v159 = vmul.f32 %v157, %v157
    %v160 = vmul.f32 %v158, %v158
    %161 = vadd.xlane.f32.xlu0 %v159
    %v162 = vpop.xlane.xlu0 %161
    %163 = vadd.xlane.f32.xlu0 %v160
    %v164 = vpop.xlane.xlu0 %163
    %v165 = vrsqrt.pop %v162
    %v166 = vmul.f32 %v165, %v162
    %v167 = vmul.f32 %v166, %v165
    %v168 = vmul.f32 0.5, %v167
    %v169 = vsub.f32 1.5, %v168
    %v170 = vmul.f32 %v165, %v169
    %v171 = vmul.f32 %v162, %v170
    %vm172 = vcmp.eq.f32.partialorder %v162, inf
    %v173 = vsel %vm172, %v162, %v171
    %vm174 = vcmp.eq.f32.partialorder %v162, 0.0
    %v175 = vand.u32 %v162, 2147483648
    %v176 = vsel %vm174, %v175, %v173
    %v177 = vrsqrt.pop %v164
    %v178 = vmul.f32 %v177, %v164
    %v179 = vmul.f32 %v178, %v177
    %v180 = vmul.f32 0.5, %v179
    %v181 = vsub.f32 1.5, %v180
    %v182 = vmul.f32 %v177, %v181
    %v183 = vmul.f32 %v164, %v182
    %vm184 = vcmp.eq.f32.partialorder %v164, inf
    %v185 = vsel %vm184, %v164, %v183
    %vm186 = vcmp.eq.f32.partialorder %v164, 0.0
    %v187 = vand.u32 %v164, 2147483648
    %v188 = vsel %vm186, %v187, %v185
    %v189 = vmax.f32 %v176, 1e-15
    %v190 = vmax.f32 %v188, 1e-15
    %191 = vmatpush.msra.mxu0 %v84
    %192 = vmatpush.msra.mxu0 %v83
    %193 = vmatpush.msra.mxu0 %v82
    %194 = vmatpush.msra.mxu0 %v81
    %195 = vmatpush.msra.mxu0 %v80
    %196 = vmatpush.msra.mxu0 %v79
    %197 = vmatpush.msra.mxu0 %v78
    %198 = vmatpush.msra.mxu0 %v77
    %199 = vmatpush.msra.mxu0 %v76
    %200 = vmatpush.msra.mxu0 %v75
    %201 = vmatpush.msra.mxu0 %v74
    %202 = vmatpush.msra.mxu0 %v73
    %203 = vmatpush.msra.mxu0 %v72
    %204 = vmatpush.msra.mxu0 %v71
    %205 = vmatpush.msra.mxu0 %v70
    %206 = vmatpush.msra.mxu0 %v69
    %207 = vmatmul.f32.gmra.mxu0 %v157
    %v208 = vpop.f32.mrf.mxu0
    %v209 = vadd.f32 0.0, %v208
    %210 = vmatmul.f32.gmra.mxu0 %v158
    %v211 = vpop.f32.mrf.mxu0
    %v212 = vadd.f32 0.0, %v211
    %213 = vdwg.mxu0
    %v214 = vmul.f32 %v209, %v209
    %v215 = vmul.f32 %v212, %v212
    %216 = vadd.xlane.f32.xlu0 %v214
    %v217 = vpop.xlane.xlu0 %216
    %218 = vadd.xlane.f32.xlu0 %v215
    %v219 = vpop.xlane.xlu0 %218
    %v220 = vrsqrt.pop %v217
    %v221 = vmul.f32 %v220, %v217
    %v222 = vmul.f32 %v221, %v220
    %v223 = vmul.f32 0.5, %v222
    %v224 = vsub.f32 1.5, %v223
    %v225 = vmul.f32 %v220, %v224
    %v226 = vmul.f32 %v217, %v225
    %vm227 = vcmp.eq.f32.partialorder %v217, inf
    %v228 = vsel %vm227, %v217, %v226
    %vm229 = vcmp.eq.f32.partialorder %v217, 0.0
    %v230 = vand.u32 %v217, 2147483648
    %v231 = vsel %vm229, %v230, %v228
    %v232 = vrsqrt.pop %v219
    %v233 = vmul.f32 %v232, %v219
    %v234 = vmul.f32 %v233, %v232
    %v235 = vmul.f32 0.5, %v234
    %v236 = vsub.f32 1.5, %v235
    %v237 = vmul.f32 %v232, %v236
    %v238 = vmul.f32 %v219, %v237
    %vm239 = vcmp.eq.f32.partialorder %v219, inf
    %v240 = vsel %vm239, %v219, %v238
    %vm241 = vcmp.eq.f32.partialorder %v219, 0.0
    %v242 = vand.u32 %v219, 2147483648
    %v243 = vsel %vm241, %v242, %v240
    %v244 = vmax.f32 %v231, 1e-15
    %v245 = vmax.f32 %v243, 1e-15
    %v246 = vrcp.pop %v189
    %v247 = vmul.f32 %v189, %v246
    %v248 = vsub.f32 1.0, %v247
    %v249 = vmul.f32 %v246, %v248
    %v250 = vadd.f32 %v246, %v249
    %vm251 = vweird.f32 %v189
    %vm252 = vweird.f32 %v246
    %vm253 = vmor %vm251, %vm252
    %v254 = vsel %vm253, %v246, %v250
    %v255 = vand.u32 2147483647, %v189
    %vm256 = vcmp.eq.f32.partialorder %v255, 8.507059e+37
    %v257 = vand.u32 %v189, 2147483648
    %v258 = vor.u32 1.1754944e-38, %v257
    %v259 = vsel %vm256, %v258, %v254
    %v260 = vmul.f32 %v244, %v259
    %v261 = vrcp.pop %v190
    %v262 = vmul.f32 %v190, %v261
    %v263 = vsub.f32 1.0, %v262
    %v264 = vmul.f32 %v261, %v263
    %v265 = vadd.f32 %v261, %v264
    %vm266 = vweird.f32 %v190
    %vm267 = vweird.f32 %v261
    %vm268 = vmor %vm266, %vm267
    %v269 = vsel %vm268, %v261, %v265
    %v270 = vand.u32 2147483647, %v190
    %vm271 = vcmp.eq.f32.partialorder %v270, 8.507059e+37
    %v272 = vand.u32 %v190, 2147483648
    %v273 = vor.u32 1.1754944e-38, %v272
    %v274 = vsel %vm271, %v273, %v269
    %v275 = vmul.f32 %v245, %v274
    %v276 = vmul.f32 %v120, %v189
    %v277 = vmul.f32 %v120, %v190
    %v278 = vmax.f32 %v276, -0.9999999
    %v279 = vmax.f32 %v277, -0.9999999
    %v280 = vmin.f32 %v278, 0.9999999
    %v281 = vmin.f32 %v279, 0.9999999
    %v282 = vadd.f32 %v280, 1.0
    %v283 = vadd.f32 %v281, 1.0
    %v284 = vsub.f32 1.0, %v280
    %v285 = vsub.f32 1.0, %v281
    %v286 = vrcp.pop %v284
    %v287 = vmul.f32 %v284, %v286
    %v288 = vsub.f32 1.0, %v287
    %v289 = vmul.f32 %v286, %v288
    %v290 = vadd.f32 %v286, %v289
    %vm291 = vweird.f32 %v284
    %vm292 = vweird.f32 %v286
    %vm293 = vmor %vm291, %vm292
    %v294 = vsel %vm293, %v286, %v290
    %v295 = vand.u32 2147483647, %v284
    %vm296 = vcmp.eq.f32.partialorder %v295, 8.507059e+37
    %v297 = vand.u32 %v284, 2147483648
    %v298 = vor.u32 1.1754944e-38, %v297
    %v299 = vsel %vm296, %v298, %v294
    %v300 = vmul.f32 %v282, %v299
    %v301 = vrcp.pop %v285
    %v302 = vmul.f32 %v285, %v301
    %v303 = vsub.f32 1.0, %v302
    %v304 = vmul.f32 %v301, %v303
    %v305 = vadd.f32 %v301, %v304
    %vm306 = vweird.f32 %v285
    %vm307 = vweird.f32 %v301
    %vm308 = vmor %vm306, %vm307
    %v309 = vsel %vm308, %v301, %v305
    %v310 = vand.u32 2147483647, %v285
    %vm311 = vcmp.eq.f32.partialorder %v310, 8.507059e+37
    %v312 = vand.u32 %v285, 2147483648
    %v313 = vor.u32 1.1754944e-38, %v312
    %v314 = vsel %vm311, %v313, %v309
    %v315 = vmul.f32 %v283, %v314
    %v316 = vlog2.pop %v300
    %v317 = vmul.f32 %v316, 0.6931472
    %v318 = vlog2.pop %v315
    %v319 = vmul.f32 %v318, 0.6931472
    %v320 = vmul.f32 %v317, 0.5
    %v321 = vmul.f32 %v319, 0.5
    %v322 = vmul.f32 %v260, %v320
    %v323 = vmul.f32 %v275, %v321
    %v324 = vtanh.pop %v322
    %v325 = vtanh.pop %v323
    %v326 = vmin.f32 %v324, 0.996
    %v327 = vmin.f32 %v325, 0.996
    %v328 = vmul.f32 %v244, %v120
    %v329 = vmul.f32 %v245, %v120
    %v330 = vrcp.pop %v328
    %v331 = vmul.f32 %v328, %v330
    %v332 = vsub.f32 1.0, %v331
    %v333 = vmul.f32 %v330, %v332
    %v334 = vadd.f32 %v330, %v333
    %vm335 = vweird.f32 %v328
    %vm336 = vweird.f32 %v330
    %vm337 = vmor %vm335, %vm336
    %v338 = vsel %vm337, %v330, %v334
    %v339 = vand.u32 2147483647, %v328
    %vm340 = vcmp.eq.f32.partialorder %v339, 8.507059e+37
    %v341 = vand.u32 %v328, 2147483648
    %v342 = vor.u32 1.1754944e-38, %v341
    %v343 = vsel %vm340, %v342, %v338
    %v344 = vmul.f32 %v326, %v343
    %v345 = vrcp.pop %v329
    %v346 = vmul.f32 %v329, %v345
    %v347 = vsub.f32 1.0, %v346
    %v348 = vmul.f32 %v345, %v347
    %v349 = vadd.f32 %v345, %v348
    %vm350 = vweird.f32 %v329
    %vm351 = vweird.f32 %v345
    %vm352 = vmor %vm350, %vm351
    %v353 = vsel %vm352, %v345, %v349
    %v354 = vand.u32 2147483647, %v329
    %vm355 = vcmp.eq.f32.partialorder %v354, 8.507059e+37
    %v356 = vand.u32 %v329, 2147483648
    %v357 = vor.u32 1.1754944e-38, %v356
    %v358 = vsel %vm355, %v357, %v353
    %v359 = vmul.f32 %v327, %v358
    %v360 = vmul.f32 %v209, %v344
    %v361 = vmul.f32 %v212, %v359
    %vm362 = vcmp.eq.f32.partialorder %v217, 0.0
    %vm363 = vcmp.eq.f32.partialorder %v219, 0.0
    %v364 = vsel %vm362, 1, 0
    %v365 = vsel %vm363, 1, 0
    %vm366 = vcmp.eq.s32.totalorder %v364, 1
    %vm367 = vcmp.eq.s32.totalorder %v365, 1
    %v368 = vsel %vm366, 0.0, %v360
    %v369 = vsel %vm367, 0.0, %v361
    %v370 = vmul.f32 %v368, %v368
    %v371 = vmul.f32 %v369, %v369
    %372 = vadd.xlane.f32.xlu0 %v370
    %v373 = vpop.xlane.xlu0 %372
    %374 = vadd.xlane.f32.xlu0 %v371
    %v375 = vpop.xlane.xlu0 %374
    %v377 = vperm.slane %v85, 0
    %v379 = vmul.f32 %v368, %v377
    %v380 = vmul.f32 %v369, %v377
    %381 = vadd.xlane.f32.xlu0 %v379
    %v382 = vpop.xlane.xlu0 %381
    %383 = vadd.xlane.f32.xlu0 %v380
    %v384 = vpop.xlane.xlu0 %383
    %s385 = smul.f32 %s50, 2.0
    %v386 = vstv %s385
    %v387 = vmul.f32 %v386, %v382
    %v388 = vmul.f32 %v386, %v384
    %v389 = vadd.f32 %v387, 1.0
    %v390 = vadd.f32 %v388, 1.0
    %s391 = smul.f32 %s50, %s52
    %v392 = vstv %s391
    %v393 = vadd.f32 %v389, %v392
    %v394 = vadd.f32 %v390, %v392
    %v395 = vmul.f32 %v393, %v368
    %v396 = vmul.f32 %v394, %v369
    %v397 = vstv %s50
    %v398 = vmul.f32 %v397, %v373
    %v399 = vmul.f32 %v397, %v375
    %v400 = vsub.f32 1.0, %v398
    %v401 = vsub.f32 1.0, %v399
    %v402 = vmul.f32 %v400, %v377
    %v403 = vmul.f32 %v401, %v377
    %v404 = vadd.f32 %v395, %v402
    %v405 = vadd.f32 %v396, %v403
    %s406 = smul.f32 %s50, %s50
    %v407 = vstv %s406
    %v408 = vmul.f32 %v407, %v373
    %v409 = vmul.f32 %v407, %v375
    %v410 = vstv %s52
    %v411 = vmul.f32 %v408, %v410
    %v412 = vmul.f32 %v409, %v410
    %v413 = vadd.f32 %v389, %v411
    %v414 = vadd.f32 %v390, %v412
    %v415 = vmax.f32 %v413, 1e-15
    %v416 = vmax.f32 %v414, 1e-15
    %v417 = vrcp.pop %v415
    %v418 = vmul.f32 %v415, %v417
    %v419 = vsub.f32 1.0, %v418
    %v420 = vmul.f32 %v417, %v419
    %v421 = vadd.f32 %v417, %v420
    %vm422 = vweird.f32 %v415
    %vm423 = vweird.f32 %v417
    %vm424 = vmor %vm422, %vm423
    %v425 = vsel %vm424, %v417, %v421
    %v426 = vand.u32 2147483647, %v415
    %vm427 = vcmp.eq.f32.partialorder %v426, 8.507059e+37
    %v428 = vand.u32 %v415, 2147483648
    %v429 = vor.u32 1.1754944e-38, %v428
    %v430 = vsel %vm427, %v429, %v425
    %v431 = vmul.f32 %v404, %v430
    %v432 = vrcp.pop %v416
    %v433 = vmul.f32 %v416, %v432
    %v434 = vsub.f32 1.0, %v433
    %v435 = vmul.f32 %v432, %v434
    %v436 = vadd.f32 %v432, %v435
    %vm437 = vweird.f32 %v416
    %vm438 = vweird.f32 %v432
    %vm439 = vmor %vm437, %vm438
    %v440 = vsel %vm439, %v432, %v436
    %v441 = vand.u32 2147483647, %v416
    %vm442 = vcmp.eq.f32.partialorder %v441, 8.507059e+37
    %v443 = vand.u32 %v416, 2147483648
    %v444 = vor.u32 1.1754944e-38, %v443
    %v445 = vsel %vm442, %v444, %v440
    %v446 = vmul.f32 %v405, %v445
    %v447 = vmul.f32 %v431, %v431
    %v448 = vmul.f32 %v446, %v446
    %449 = vadd.xlane.f32.xlu0 %v447
    %v450 = vpop.xlane.xlu0 %449
    %451 = vadd.xlane.f32.xlu0 %v448
    %v452 = vpop.xlane.xlu0 %451
    %v453 = vmax.f32 %v450, 0.0
    %v454 = vmax.f32 %v452, 0.0
    %v455 = vrsqrt.pop %v453
    %v456 = vmul.f32 %v455, %v453
    %v457 = vmul.f32 %v456, %v455
    %v458 = vmul.f32 0.5, %v457
    %v459 = vsub.f32 1.5, %v458
    %v460 = vmul.f32 %v455, %v459
    %v461 = vmul.f32 %v453, %v460
    %vm462 = vcmp.eq.f32.partialorder %v453, inf
    %v463 = vsel %vm462, %v453, %v461
    %vm464 = vcmp.eq.f32.partialorder %v453, 0.0
    %v465 = vand.u32 %v453, 2147483648
    %v466 = vsel %vm464, %v465, %v463
    %v467 = vrsqrt.pop %v454
    %v468 = vmul.f32 %v467, %v454
    %v469 = vmul.f32 %v468, %v467
    %v470 = vmul.f32 0.5, %v469
    %v471 = vsub.f32 1.5, %v470
    %v472 = vmul.f32 %v467, %v471
    %v473 = vmul.f32 %v454, %v472
    %vm474 = vcmp.eq.f32.partialorder %v454, inf
    %v475 = vsel %vm474, %v454, %v473
    %vm476 = vcmp.eq.f32.partialorder %v454, 0.0
    %v477 = vand.u32 %v454, 2147483648
    %v478 = vsel %vm476, %v477, %v475
    %v479 = vmax.f32 %v466, 1e-15
    %v480 = vmax.f32 %v478, 1e-15
    %v481 = vstv %s66
    %v482 = vrcp.pop %v481
    %v483 = vmul.f32 %v481, %v482
    %v484 = vsub.f32 1.0, %v483
    %v485 = vmul.f32 %v482, %v484
    %v486 = vadd.f32 %v482, %v485
    %vm487 = vweird.f32 %v481
    %vm488 = vweird.f32 %v482
    %vm489 = vmor %vm487, %vm488
    %v490 = vsel %vm489, %v482, %v486
    %v491 = vand.u32 2147483647, %v481
    %vm492 = vcmp.eq.f32.partialorder %v491, 8.507059e+37
    %v493 = vand.u32 %v481, 2147483648
    %v494 = vor.u32 1.1754944e-38, %v493
    %v495 = vsel %vm492, %v494, %v490
    %s496 = vtos %v495
    %s497 = smul.f32 0.996, %s496
    %v498 = vstv %s497
    %v499 = vmin.f32 %v479, %v498
    %v500 = vmin.f32 %v480, %v498
    %v501 = vmul.f32 %v120, %v499
    %v502 = vmul.f32 %v120, %v500
    %v503 = vmax.f32 %v501, -0.9999999
    %v504 = vmax.f32 %v502, -0.9999999
    %v505 = vmin.f32 %v503, 0.9999999
    %v506 = vmin.f32 %v504, 0.9999999
    %v507 = vadd.f32 %v505, 1.0
    %v508 = vadd.f32 %v506, 1.0
    %v509 = vsub.f32 1.0, %v505
    %v510 = vsub.f32 1.0, %v506
    %v511 = vrcp.pop %v509
    %v512 = vmul.f32 %v509, %v511
    %v513 = vsub.f32 1.0, %v512
    %v514 = vmul.f32 %v511, %v513
    %v515 = vadd.f32 %v511, %v514
    %vm516 = vweird.f32 %v509
    %vm517 = vweird.f32 %v511
    %vm518 = vmor %vm516, %vm517
    %v519 = vsel %vm518, %v511, %v515
    %v520 = vand.u32 2147483647, %v509
    %vm521 = vcmp.eq.f32.partialorder %v520, 8.507059e+37
    %v522 = vand.u32 %v509, 2147483648
    %v523 = vor.u32 1.1754944e-38, %v522
    %v524 = vsel %vm521, %v523, %v519
    %v525 = vmul.f32 %v507, %v524
    %v526 = vrcp.pop %v510
    %v527 = vmul.f32 %v510, %v526
    %v528 = vsub.f32 1.0, %v527
    %v529 = vmul.f32 %v526, %v528
    %v530 = vadd.f32 %v526, %v529
    %vm531 = vweird.f32 %v510
    %vm532 = vweird.f32 %v526
    %vm533 = vmor %vm531, %vm532
    %v534 = vsel %vm533, %v526, %v530
    %v535 = vand.u32 2147483647, %v510
    %vm536 = vcmp.eq.f32.partialorder %v535, 8.507059e+37
    %v537 = vand.u32 %v510, 2147483648
    %v538 = vor.u32 1.1754944e-38, %v537
    %v539 = vsel %vm536, %v538, %v534
    %v540 = vmul.f32 %v508, %v539
    %v541 = vlog2.pop %v525
    %v542 = vmul.f32 %v541, 0.6931472
    %v543 = vlog2.pop %v540
    %v544 = vmul.f32 %v543, 0.6931472
    %v545 = vmul.f32 %v542, 0.5
    %v546 = vmul.f32 %v544, 0.5
    %v547 = vmul.f32 %v120, %v479
    %v548 = vmul.f32 %v120, %v480
    %v549 = vrcp.pop %v547
    %v550 = vmul.f32 %v547, %v549
    %v551 = vsub.f32 1.0, %v550
    %v552 = vmul.f32 %v549, %v551
    %v553 = vadd.f32 %v549, %v552
    %vm554 = vweird.f32 %v547
    %vm555 = vweird.f32 %v549
    %vm556 = vmor %vm554, %vm555
    %v557 = vsel %vm556, %v549, %v553
    %v558 = vand.u32 2147483647, %v547
    %vm559 = vcmp.eq.f32.partialorder %v558, 8.507059e+37
    %v560 = vand.u32 %v547, 2147483648
    %v561 = vor.u32 1.1754944e-38, %v560
    %v562 = vsel %vm559, %v561, %v557
    %v563 = vmul.f32 %v545, %v562
    %v564 = vrcp.pop %v548
    %v565 = vmul.f32 %v548, %v564
    %v566 = vsub.f32 1.0, %v565
    %v567 = vmul.f32 %v564, %v566
    %v568 = vadd.f32 %v564, %v567
    %vm569 = vweird.f32 %v548
    %vm570 = vweird.f32 %v564
    %vm571 = vmor %vm569, %vm570
    %v572 = vsel %vm571, %v564, %v568
    %v573 = vand.u32 2147483647, %v548
    %vm574 = vcmp.eq.f32.partialorder %v573, 8.507059e+37
    %v575 = vand.u32 %v548, 2147483648
    %v576 = vor.u32 1.1754944e-38, %v575
    %v577 = vsel %vm574, %v576, %v572
    %v578 = vmul.f32 %v546, %v577
    %v579 = vmul.f32 %v431, %v563
    %v580 = vmul.f32 %v446, %v578
    %v581 = vld [vmem:[%s4] sm:$0xf]
    %v582 = vld [vmem:[%s4 + $0x4] sm:$0xf]
    %v583 = vpack.c.bf16 %v580, %v579
    %v586 = vunpack.c.l.b16 %v581
    %v587 = vunpack.c.l.b16 %v582
    %v588 = vpack.c.b16 %v587, %v586
    %vm589 = vcmask 130048
    %v591 = vsel %vm589, %v588, 0
    %593 = vmatpush.bf16.msra.mxu0 0
    %594 = vmatpush.bf16.msra.mxu0 0
    %595 = vmatpush.bf16.msra.mxu0 0
    %596 = vmatpush.bf16.msra.mxu0 0
    %597 = vmatpush.bf16.msra.mxu0 0
    %598 = vmatpush.bf16.msra.mxu0 0
    %599 = vmatpush.bf16.msra.mxu0 0
    %600 = vmatpush.bf16.msra.mxu0 %v583
    %601 = vmatmul.bf16.gmra.mxu0 %v591
    %v602 = vpop.f32.mrf.mxu0
    %v603 = vadd.f32 0.0, %v602
    %v604 = vpop.f32.mrf.mxu0
    %v605 = vadd.f32 0.0, %v604
    %606 = vdwg.mxu0
    %v607 = vstv %s51
    %v608 = vrsqrt.pop %v607
    %v609 = vmul.f32 %v608, %v607
    %v610 = vmul.f32 %v609, %v608
    %v611 = vmul.f32 0.5, %v610
    %v612 = vsub.f32 1.5, %v611
    %v613 = vmul.f32 %v608, %v612
    %v614 = vmul.f32 %v607, %v613
    %vm615 = vcmp.eq.f32.partialorder %v607, inf
    %v616 = vsel %vm615, %v607, %v614
    %vm617 = vcmp.eq.f32.partialorder %v607, 0.0
    %v618 = vand.u32 %v607, 2147483648
    %v619 = vsel %vm617, %v618, %v616
    %s620 = vtos %v619
    %v621 = vmul.f32 %v603, %v603
    %v622 = vmul.f32 %v605, %v605
    %623 = vadd.xlane.f32.xlu0 %v621
    %v624 = vpop.xlane.xlu0 %623
    %625 = vadd.xlane.f32.xlu0 %v622
    %v626 = vpop.xlane.xlu0 %625
    %v627 = vmax.f32 %v624, 0.0
    %v628 = vmax.f32 %v626, 0.0
    %v629 = vrsqrt.pop %v627
    %v630 = vmul.f32 %v629, %v627
    %v631 = vmul.f32 %v630, %v629
    %v632 = vmul.f32 0.5, %v631
    %v633 = vsub.f32 1.5, %v632
    %v634 = vmul.f32 %v629, %v633
    %v635 = vmul.f32 %v627, %v634
    %vm636 = vcmp.eq.f32.partialorder %v627, inf
    %v637 = vsel %vm636, %v627, %v635
    %vm638 = vcmp.eq.f32.partialorder %v627, 0.0
    %v639 = vand.u32 %v627, 2147483648
    %v640 = vsel %vm638, %v639, %v637
    %v641 = vrsqrt.pop %v628
    %v642 = vmul.f32 %v641, %v628
    %v643 = vmul.f32 %v642, %v641
    %v644 = vmul.f32 0.5, %v643
    %v645 = vsub.f32 1.5, %v644
    %v646 = vmul.f32 %v641, %v645
    %v647 = vmul.f32 %v628, %v646
    %vm648 = vcmp.eq.f32.partialorder %v628, inf
    %v649 = vsel %vm648, %v628, %v647
    %vm650 = vcmp.eq.f32.partialorder %v628, 0.0
    %v651 = vand.u32 %v628, 2147483648
    %v652 = vsel %vm650, %v651, %v649
    %v653 = vmax.f32 %v640, 1e-15
    %v654 = vmax.f32 %v652, 1e-15
    %v655 = vstv %s66
    %v656 = vrcp.pop %v655
    %v657 = vmul.f32 %v655, %v656
    %v658 = vsub.f32 1.0, %v657
    %v659 = vmul.f32 %v656, %v658
    %v660 = vadd.f32 %v656, %v659
    %vm661 = vweird.f32 %v655
    %vm662 = vweird.f32 %v656
    %vm663 = vmor %vm661, %vm662
    %v664 = vsel %vm663, %v656, %v660
    %v665 = vand.u32 2147483647, %v655
    %vm666 = vcmp.eq.f32.partialorder %v665, 8.507059e+37
    %v667 = vand.u32 %v655, 2147483648
    %v668 = vor.u32 1.1754944e-38, %v667
    %v669 = vsel %vm666, %v668, %v664
    %s670 = vtos %v669
    %s671 = smul.f32 3.106303, %s670
    %v672 = vstv %s671
    %vm673 = vcmp.gt.f32.partialorder %v653, %v672
    %vm674 = vcmp.gt.f32.partialorder %v654, %v672
    %v675 = vrcp.pop %v653
    %v676 = vmul.f32 %v653, %v675
    %v677 = vsub.f32 1.0, %v676
    %v678 = vmul.f32 %v675, %v677
    %v679 = vadd.f32 %v675, %v678
    %vm680 = vweird.f32 %v653
    %vm681 = vweird.f32 %v675
    %vm682 = vmor %vm680, %vm681
    %v683 = vsel %vm682, %v675, %v679
    %v684 = vand.u32 2147483647, %v653
    %vm685 = vcmp.eq.f32.partialorder %v684, 8.507059e+37
    %v686 = vand.u32 %v653, 2147483648
    %v687 = vor.u32 1.1754944e-38, %v686
    %v688 = vsel %vm685, %v687, %v683
    %v689 = vmul.f32 %v672, %v688
    %v690 = vrcp.pop %v654
    %v691 = vmul.f32 %v654, %v690
    %v692 = vsub.f32 1.0, %v691
    %v693 = vmul.f32 %v690, %v692
    %v694 = vadd.f32 %v690, %v693
    %vm695 = vweird.f32 %v654
    %vm696 = vweird.f32 %v690
    %vm697 = vmor %vm695, %vm696
    %v698 = vsel %vm697, %v690, %v694
    %v699 = vand.u32 2147483647, %v654
    %vm700 = vcmp.eq.f32.partialorder %v699, 8.507059e+37
    %v701 = vand.u32 %v654, 2147483648
    %v702 = vor.u32 1.1754944e-38, %v701
    %v703 = vsel %vm700, %v702, %v698
    %v704 = vmul.f32 %v672, %v703
    %v705 = vmul.f32 %v603, %v689
    %v706 = vmul.f32 %v605, %v704
    %v707 = vsel %vm673, 1, 0
    %v708 = vsel %vm674, 1, 0
    %vm709 = vcmp.eq.s32.totalorder %v707, 1
    %vm710 = vcmp.eq.s32.totalorder %v708, 1
    %v711 = vsel %vm709, %v705, %v603
    %v712 = vsel %vm710, %v706, %v605
    %v713 = vtanh.pop %v711
    %v714 = vtanh.pop %v712
    %v715 = vmul.f32 %v713, %v713
    %v716 = vmul.f32 %v714, %v714
    %717 = vadd.xlane.f32.xlu0 %v715
    %v718 = vpop.xlane.xlu0 %717
    %719 = vadd.xlane.f32.xlu0 %v716
    %v720 = vpop.xlane.xlu0 %719
    %v721 = vmax.f32 %v718, 0.0
    %v722 = vmax.f32 %v720, 0.0
    %v723 = vrsqrt.pop %v721
    %v724 = vmul.f32 %v723, %v721
    %v725 = vmul.f32 %v724, %v723
    %v726 = vmul.f32 0.5, %v725
    %v727 = vsub.f32 1.5, %v726
    %v728 = vmul.f32 %v723, %v727
    %v729 = vmul.f32 %v721, %v728
    %vm730 = vcmp.eq.f32.partialorder %v721, inf
    %v731 = vsel %vm730, %v721, %v729
    %vm732 = vcmp.eq.f32.partialorder %v721, 0.0
    %v733 = vand.u32 %v721, 2147483648
    %v734 = vsel %vm732, %v733, %v731
    %v735 = vrsqrt.pop %v722
    %v736 = vmul.f32 %v735, %v722
    %v737 = vmul.f32 %v736, %v735
    %v738 = vmul.f32 0.5, %v737
    %v739 = vsub.f32 1.5, %v738
    %v740 = vmul.f32 %v735, %v739
    %v741 = vmul.f32 %v722, %v740
    %vm742 = vcmp.eq.f32.partialorder %v722, inf
    %v743 = vsel %vm742, %v722, %v741
    %vm744 = vcmp.eq.f32.partialorder %v722, 0.0
    %v745 = vand.u32 %v722, 2147483648
    %v746 = vsel %vm744, %v745, %v743
    %v747 = vmax.f32 %v734, 1e-15
    %v748 = vmax.f32 %v746, 1e-15
    %v749 = vstv %s620
    %v750 = vmul.f32 %v749, %v747
    %v751 = vmul.f32 %v749, %v748
    %v752 = vtanh.pop %v750
    %v753 = vtanh.pop %v751
    %v754 = vmin.f32 %v752, 0.996
    %v755 = vmin.f32 %v753, 0.996
    %v756 = vrcp.pop %v750
    %v757 = vmul.f32 %v750, %v756
    %v758 = vsub.f32 1.0, %v757
    %v759 = vmul.f32 %v756, %v758
    %v760 = vadd.f32 %v756, %v759
    %vm761 = vweird.f32 %v750
    %vm762 = vweird.f32 %v756
    %vm763 = vmor %vm761, %vm762
    %v764 = vsel %vm763, %v756, %v760
    %v765 = vand.u32 2147483647, %v750
    %vm766 = vcmp.eq.f32.partialorder %v765, 8.507059e+37
    %v767 = vand.u32 %v750, 2147483648
    %v768 = vor.u32 1.1754944e-38, %v767
    %v769 = vsel %vm766, %v768, %v764
    %v770 = vmul.f32 %v754, %v769
    %v771 = vrcp.pop %v751
    %v772 = vmul.f32 %v751, %v771
    %v773 = vsub.f32 1.0, %v772
    %v774 = vmul.f32 %v771, %v773
    %v775 = vadd.f32 %v771, %v774
    %vm776 = vweird.f32 %v751
    %vm777 = vweird.f32 %v771
    %vm778 = vmor %vm776, %vm777
    %v779 = vsel %vm778, %v771, %v775
    %v780 = vand.u32 2147483647, %v751
    %vm781 = vcmp.eq.f32.partialorder %v780, 8.507059e+37
    %v782 = vand.u32 %v751, 2147483648
    %v783 = vor.u32 1.1754944e-38, %v782
    %v784 = vsel %vm781, %v783, %v779
    %v785 = vmul.f32 %v755, %v784
    %v786 = vmul.f32 %v713, %v770
    %v787 = vmul.f32 %v714, %v785
    %788 = vst [vmem:[%s5] sm:$0xff] %v786
    %789 = vst [vmem:[%s5 + $0x8] sm:$0xff] %v787
    // Predicated region
    $region30: #{hgcn_residual_forward.2} parent=1 // pred_check
      _
    $region31: #{hgcn_residual_forward.2} parent=1 // pred_check_branch
      %791 = sbr.rel (0) target = $region33
    $region32: #{hgcn_residual_forward.2} parent=1 // pred_region
      _
    $region33: #{hgcn_residual_forward.2} parent=1 // pred_fallthru
      _
    // Predicated region
    $region34: #{hgcn_residual_forward.2} parent=1 // pred_check
      _
    $region35: #{hgcn_residual_forward.2} parent=1 // pred_check_branch
      %793 = sbr.rel (0) target = $region37
    $region36: #{hgcn_residual_forward.2} parent=1 // pred_region
      _
    $region37: #{hgcn_residual_forward.2} parent=1 // pred_fallthru
      _
    %794 = vsyncpa [#allocation3], 1
    %795 = vsyncpa [#allocation4], 1

</llo_original>
